<compile_context>
chip_gen: v6e
topology: v6e:2x2x1
jax: 0.10.0
libtpu: 0.0.40
codegen_flags: <defaults>
</compile_context>

<pallas_src>
import functools

import jax
import jax.numpy as jnp
import numpy as np
from jax.experimental import pallas as pl
from jax.experimental.pallas import tpu as pltpu


# ------------------------------ fused Pallas kernel ------------------------------

def _lscnn_kernel(x1_ref, avp_ref, cm_ref, cb_ref, fw_ref, fb_ref,
                  wih1_ref, wih2_ref, whh_ref, b_ref, wl_ref, out_ref, *,
                  B, B_pad, T, Fw, K, OC, pool, stride, H, L2):
    """Whole LSCNN forward in one launch.

    x1: (T*B_pad, E*Fw) branch-1 LSTM inputs, time-major rows (t*B_pad + b).
    avp: (B_pad, T+K-1, Fw) row-padded conv input.
    cm: (K*Fw, Fw*OC) conv folded to a dense operator over a row-wise im2col,
        output lanes ordered (col j, oc); cb: (1, Fw*OC).
    fw: (Ho*Wo*OC, T*L2) fc1 with rows permuted to pooled (io, jo, oc) order;
        fb: (1, T*L2).
    wih1: (E*Fw, 4G), wih2: (L2, 4G), whh: (2H=G, 4G), b: (1, 4G) merged dual-branch
        LSTM weights; gate order (i, f, o, g), per-gate lanes [branch1 H | branch2 H];
        whh is block-diagonal across branches; b = b_ih + b_hh.
    wl: (1, G) = [logic_w | logic_w].
    out: (B, 1) averaged sigmoid probability.
    """
    f32 = jnp.float32
    G = 2 * H

    # ---------------- conv trunk (off the recurrence critical path) ----------------
    xp = avp_ref[...]                                               # (B_pad, T+K-1, Fw)
    # row-wise im2col: lanes ordered (dy, input col); one MXU matmul for the conv.
    cols = jnp.concatenate([xp[:, dy:dy + T, :] for dy in range(K)], axis=-1)
    conv = jnp.dot(cols.reshape(B_pad * T, K * Fw), cm_ref[...],
                   preferred_element_type=f32) + cb_ref[...]
    conv = jnp.maximum(conv, 0.0).reshape(B_pad, T, Fw * OC)        # lanes (j, oc)

    Ho = (T - pool) // stride + 1
    Wo = (Fw - pool) // stride + 1
    # column (width) pooling, vectorized over all rows at once
    cparts = []
    for jo in range(Wo):
        g = conv[:, :, (stride * jo) * OC:(stride * jo + 1) * OC]
        for r in range(1, pool):
            lo = (stride * jo + r) * OC
            g = jnp.maximum(g, conv[:, :, lo:lo + OC])
        cparts.append(g)
    cmax = jnp.concatenate(cparts, axis=-1)                         # (B_pad, T, Wo*OC)
    # row (height) pooling -> compact (io, jo, oc) lane order (matches fw rows)
    rparts = []
    for io in range(Ho):
        v = cmax[:, stride * io, :]
        for r in range(1, pool):
            v = jnp.maximum(v, cmax[:, stride * io + r, :])
        rparts.append(v)
    flat = jnp.concatenate(rparts, axis=-1)                         # (B_pad, Ho*Wo*OC)

    x2 = jnp.dot(flat, fw_ref[...], preferred_element_type=f32) + fb_ref[...]
    # TODO(synk): torch.nn.Dropout after fc1 omitted (inference identity).
    x2 = jnp.maximum(x2, 0.0)                                       # (B_pad, T*L2), lanes (t, l)

    # --------- hoisted LSTM input projections (both branches, merged layout) ---------
    wih2 = wih2_ref[...]
    xg1 = jnp.dot(x1_ref[...], wih1_ref[...],
                  preferred_element_type=f32) + b_ref[...]          # (T*B_pad, 4G)
    xpre = []
    for t in range(T):                                              # off critical path
        xg2_t = jnp.dot(x2[:, t * L2:(t + 1) * L2], wih2,
                        preferred_element_type=f32)                 # (B_pad, 4G)
        xpre.append(xg1[t * B_pad:(t + 1) * B_pad, :] + xg2_t)      # sublane-aligned slice

    # ------------- merged dual-branch LSTM recurrence (critical path) -------------
    whh = whh_ref[...]
    h = jnp.zeros((B_pad, G), f32)
    c = jnp.zeros((B_pad, G), f32)
    s = jnp.zeros((B_pad, G), f32)
    for t in range(T):
        gates = xpre[t] + jnp.dot(h, whh, preferred_element_type=f32)   # (B_pad, 4G)
        sg = jax.nn.sigmoid(gates[:, 0:3 * G])                      # i | f | o (one EUP chain)
        gg = jnp.tanh(gates[:, 3 * G:4 * G])                        # g
        c = sg[:, G:2 * G] * c + sg[:, 0:G] * gg
        h = sg[:, 2 * G:3 * G] * jnp.tanh(c)
        s = s + h

    # --------------- logic layer + sigmoid + branch average, in-kernel ---------------
    sl = s * wl_ref[...]                                            # (B_pad, G)
    l1 = jnp.sum(sl[:, 0:H], axis=-1, keepdims=True)                # branch-1 logit
    l2 = jnp.sum(sl[:, H:G], axis=-1, keepdims=True)                # branch-2 logit
    out = 0.5 * (jax.nn.sigmoid(l1) + jax.nn.sigmoid(l2))           # (B_pad, 1)
    out_ref[...] = out[0:B, :]


def lscnn_fused_call(x1_tm, av_p, kp, mp):
    B = mp['batch_size']; D = mp['day']; F = mp['a_field_size']
    K = mp['lscnn_conv2_kernel']; OC = mp['lscnn_conv2_outputsize']
    pool = mp['lscnn_pool_kernel']; H = mp['hidden_size']; L2 = mp['lstm_2_input_size']
    kern = functools.partial(_lscnn_kernel, B=B, B_pad=kp['b_pad'], T=D, Fw=F, K=K,
                             OC=OC, pool=pool, stride=2, H=H, L2=L2)
    # Single invocation, whole-array blocks (total VMEM footprint ~150 KB: no grid,
    # no tiling, no extra buffering needed on v5e/v6e/v7x).
    return pl.pallas_call(
        kern,
        out_shape=jax.ShapeDtypeStruct((B, 1), jnp.float32),
    )(x1_tm, av_p, kp['conv_mat'], kp['conv_bias'], kp['fc1_w'], kp['fc1_b'],
      kp['wih1'], kp['wih2'], kp['whh'], kp['bias'], kp['w_logic2'])


# ---------------------------------- parameters ----------------------------------

def init_params(key, mp):
    """Parameters in PyTorch-equivalent layouts (fc1_w stored input-major = weight.T)."""
    E = mp['embedding_size']; H = mp['hidden_size']; D = mp['day']
    F = mp['a_field_size']; K = mp['lscnn_conv2_kernel']
    OC = mp['lscnn_conv2_outputsize']; pool = mp['lscnn_pool_kernel']
    L2 = mp['lstm_2_input_size']
    h2 = (D - K + 3 - pool) // 2 + 1
    w2 = (F - K + 3 - pool) // 2 + 1
    lin_in = OC * h2 * w2

    keys = jax.random.split(key, 16)

    def nrm(k_, shape, scale=0.1):
        return (scale * jax.random.normal(k_, shape)).astype(jnp.float32)

    return dict(
        a_emb=nrm(keys[0], (mp['a_feat_size'], E)),
        u_emb=nrm(keys[1], (mp['u_feat_size'], E)),      # unused in forward (parity)
        conv_w=nrm(keys[2], (OC, 1, K, K)),
        conv_b=nrm(keys[3], (OC,)),
        fc1_w=nrm(keys[4], (lin_in, D * L2)),
        fc1_b=nrm(keys[5], (D * L2,)),
        lstm1_w_ih=nrm(keys[6], (4 * H, E * F)),         # torch layout, gates i,f,g,o
        lstm1_w_hh=nrm(keys[7], (4 * H, H)),
        lstm1_b_ih=nrm(keys[8], (4 * H,)),
        lstm1_b_hh=nrm(keys[9], (4 * H,)),
        lstm2_w_ih=nrm(keys[10], (4 * H, L2)),
        lstm2_w_hh=nrm(keys[11], (4 * H, H)),
        lstm2_b_ih=nrm(keys[12], (4 * H,)),
        lstm2_b_hh=nrm(keys[13], (4 * H,)),
        logic_w=nrm(keys[14], (1, H)),                   # shared by both branches
    )


def prep_kernel_params(params, mp):
    """One-time fold of PyTorch-layout parameters into kernel-ready tensors."""
    E = mp['embedding_size']; H = mp['hidden_size']; D = mp['day']
    F = mp['a_field_size']; K = mp['lscnn_conv2_kernel']
    OC = mp['lscnn_conv2_outputsize']; pool = mp['lscnn_pool_kernel']
    L2 = mp['lstm_2_input_size']
    pad = (K - 1) // 2
    h2 = (D - K + 3 - pool) // 2 + 1
    w2 = (F - K + 3 - pool) // 2 + 1
    G = 2 * H
    B = mp['batch_size']
    B_pad = ((B + 7) // 8) * 8                                       # sublane-aligned batch

    # conv weights folded into a dense (K*F, F*OC) operator over a row-wise im2col
    # ('same' horizontal padding absorbed into the matrix; vertical pad in wrapper).
    cw = np.asarray(params['conv_w'], np.float32)                    # (OC, 1, K, K)
    M = np.zeros((K * F, F * OC), np.float32)
    for dy in range(K):
        for j in range(F):                                           # output column
            for dx in range(K):
                f = j + dx - pad                                     # input column
                if 0 <= f < F:
                    M[dy * F + f, j * OC:(j + 1) * OC] = cw[:, 0, dy, dx]
    conv_bias = np.tile(np.asarray(params['conv_b'], np.float32), F).reshape(1, F * OC)

    # fc1 rows permuted from PyTorch NCHW-flatten (oc, io, jo) to the kernel's pooled
    # output order (io, jo, oc).
    perm = np.asarray([oc * (h2 * w2) + io * w2 + jo
                       for io in range(h2) for jo in range(w2) for oc in range(OC)],
                      np.int32)
    fc1_w = np.asarray(params['fc1_w'], np.float32)[perm]
    fc1_b = np.asarray(params['fc1_b'], np.float32).reshape(1, -1)

    # Merged dual-branch LSTM: gate order (i, f, o, g); per-gate lanes [br1 H | br2 H];
    # W_hh block-diagonal across branches; biases fused (b_ih + b_hh).
    def place_cols(w_torch, br, n_in):
        w = np.asarray(w_torch, np.float32)                          # (4H, n_in), i,f,g,o
        wi, wf, wg, wo = w[0:H], w[H:2 * H], w[2 * H:3 * H], w[3 * H:4 * H]
        out = np.zeros((n_in, 4 * G), np.float32)
        for gi, blk in enumerate((wi, wf, wo, wg)):                  # merged order i,f,o,g
            out[:, gi * G + br * H: gi * G + br * H + H] = blk.T
        return out

    def place_bias(b_ih, b_hh, br):
        b = np.asarray(b_ih, np.float32) + np.asarray(b_hh, np.float32)
        bi, bf, bg, bo = b[0:H], b[H:2 * H], b[2 * H:3 * H], b[3 * H:4 * H]
        out = np.zeros((4 * G,), np.float32)
        for gi, blk in enumerate((bi, bf, bo, bg)):
            out[gi * G + br * H: gi * G + br * H + H] = blk
        return out

    wih1 = place_cols(params['lstm1_w_ih'], 0, E * F)                # (E*F, 4G)
    wih2 = place_cols(params['lstm2_w_ih'], 1, L2)                   # (L2, 4G)
    whh = np.concatenate([place_cols(params['lstm1_w_hh'], 0, H),
                          place_cols(params['lstm2_w_hh'], 1, H)], axis=0)   # (2H, 4G)
    bias = (place_bias(params['lstm1_b_ih'], params['lstm1_b_hh'], 0)
            + place_bias(params['lstm2_b_ih'], params['lstm2_b_hh'], 1)).reshape(1, 4 * G)

    wl = np.asarray(params['logic_w'], np.float32).reshape(1, H)
    wl2 = np.concatenate([wl, wl], axis=-1)                          # (1, 2H)

    return dict(
        b_pad=B_pad,
        a_emb=params['a_emb'],
        conv_mat=jnp.asarray(M), conv_bias=jnp.asarray(conv_bias),
        fc1_w=jnp.asarray(fc1_w), fc1_b=jnp.asarray(fc1_b),
        wih1=jnp.asarray(wih1), wih2=jnp.asarray(wih2), whh=jnp.asarray(whh),
        bias=jnp.asarray(bias), w_logic2=jnp.asarray(wl2),
    )


# ------------------------------------ forward ------------------------------------

def lscnn_forward(kp, mp, ui, uv, ai, av, y, lossFun='BCE'):
    del ui, uv  # u_embeddings / ui / uv are unused in the reference forward()
    B = mp['batch_size']; D = mp['day']; F = mp['a_field_size']
    E = mp['embedding_size']; K = mp['lscnn_conv2_kernel']
    pad = (K - 1) // 2
    B_pad = kp['b_pad']

    # branch-1 input: embedding gather * value, time-major, batch padded to B_pad
    # (single XLA fusion; everything downstream happens inside the one kernel).
    a_emb = jnp.take(kp['a_emb'], ai, axis=0) * av[..., None]        # (B, D, F, E)
    x1 = a_emb.reshape(B, D, F * E).transpose(1, 0, 2)               # (D, B, F*E)
    x1 = jnp.pad(x1, ((0, 0), (0, B_pad - B), (0, 0))).reshape(D * B_pad, F * E)

    # conv input: batch padded + vertical 'same' padding
    av_p = jnp.pad(av.astype(jnp.float32), ((0, B_pad - B), (pad, pad), (0, 0)))

    out = lscnn_fused_call(x1, av_p, kp, mp)                         # (B, 1)

    esp = 1e-05
    y_true_bool = jnp.where(y >= esp, 1.0, 0.0).astype(jnp.float32)
    p = jnp.clip(out, 1e-7, 1.0 - 1e-7)
    if lossFun == 'BCE':
        loss = -jnp.mean(y_true_bool * jnp.log(p) + (1.0 - y_true_bool) * jnp.log(1.0 - p))
    else:
        loss = jnp.mean((out - y) ** 2)
    # TODO(synk): setMask() is not defined in the reference source; filtered_y /
    # filtered_pred_y outputs are not reproduced.
    return loss, out


# -------------------------------------- main --------------------------------------

if __name__ == "__main__":
    mp = dict(device='tpu', batch_size=2, day=8, a_feat_size=20, u_feat_size=10,
              a_field_size=4, u_field_size=3, embedding_size=8, hidden_size=32,
              lstm_2_input_size=16, lscnn_conv2_kernel=3, lscnn_conv2_outputsize=4,
              lscnn_pool_kernel=2, dropout_p=0.1)

    params = init_params(jax.random.PRNGKey(0), mp)
    kparams = prep_kernel_params(params, mp)

    B, D, F = mp['batch_size'], mp['day'], mp['a_field_size']
    kd = jax.random.split(jax.random.PRNGKey(1), 5)
    ui = jax.random.randint(kd[0], (B, mp['u_field_size']), 0, mp['u_feat_size'])
    uv = jax.random.uniform(kd[1], (B, mp['u_field_size']), dtype=jnp.float32)
    ai = jax.random.randint(kd[2], (B, D, F), 0, mp['a_feat_size'])
    av = jax.random.uniform(kd[3], (B, D, F), dtype=jnp.float32)
    y = jax.random.uniform(kd[4], (B, 1), dtype=jnp.float32)
    y = jnp.where(y > 0.5, y, 0.0)   # exercise both branches of the >= eps threshold

    fwd = jax.jit(functools.partial(lscnn_forward, kparams, mp))
    loss, out = fwd(ui, uv, ai, av, y)
    jax.block_until_ready((loss, out))
    assert out.shape == (B, 1) and loss.shape == ()
    assert bool(jnp.all(jnp.isfinite(out))) and bool(jnp.isfinite(loss))
    print("KERNEL_OK")
</pallas_src>

<mosaic_0001>
module attributes {stable_mosaic.version = 11 : i64} {
  func.func @_lscnn_kernel(%arg0: memref<64x32xf32, #tpu.memory_space<vmem>>, %arg1: memref<8x10x4xf32, #tpu.memory_space<vmem>>, %arg2: memref<12x16xf32, #tpu.memory_space<vmem>>, %arg3: memref<1x16xf32, #tpu.memory_space<vmem>>, %arg4: memref<32x128xf32, #tpu.memory_space<vmem>>, %arg5: memref<1x128xf32, #tpu.memory_space<vmem>>, %arg6: memref<32x256xf32, #tpu.memory_space<vmem>>, %arg7: memref<16x256xf32, #tpu.memory_space<vmem>>, %arg8: memref<64x256xf32, #tpu.memory_space<vmem>>, %arg9: memref<1x256xf32, #tpu.memory_space<vmem>>, %arg10: memref<1x64xf32, #tpu.memory_space<vmem>>, %arg11: memref<2x1xf32, #tpu.memory_space<vmem>>) attributes {dimension_semantics = [], scalar_prefetch = 0 : i64, scratch_operands = 0 : i64, tpu.core_type = #tpu.core_type<tc>} {
    %c0 = arith.constant 0 : index
    %c0_0 = arith.constant 0 : index
    %c0_1 = arith.constant 0 : index
    %0 = vector.load %arg1[%c0, %c0_0, %c0_1] : memref<8x10x4xf32, #tpu.memory_space<vmem>>, vector<8x10x4xf32>
    %1 = vector.extract_strided_slice %0 {offsets = [0, 0, 0], sizes = [8, 8, 4], strides = [1, 1, 1]} : vector<8x10x4xf32> to vector<8x8x4xf32>
    %2 = vector.extract_strided_slice %0 {offsets = [0, 1, 0], sizes = [8, 8, 4], strides = [1, 1, 1]} : vector<8x10x4xf32> to vector<8x8x4xf32>
    %3 = vector.extract_strided_slice %0 {offsets = [0, 2, 0], sizes = [8, 8, 4], strides = [1, 1, 1]} : vector<8x10x4xf32> to vector<8x8x4xf32>
    %4 = tpu.concatenate %1, %2, %3 in 2 : vector<8x8x4xf32>, vector<8x8x4xf32>, vector<8x8x4xf32> -> vector<8x8x12xf32>
    %5 = vector.shape_cast %4 : vector<8x8x12xf32> to vector<64x12xf32>
    %c0_2 = arith.constant 0 : index
    %c0_3 = arith.constant 0 : index
    %6 = vector.load %arg2[%c0_2, %c0_3] : memref<12x16xf32, #tpu.memory_space<vmem>>, vector<12x16xf32>
    %cst = arith.constant dense<0.000000e+00> : vector<64x16xf32>
    %7 = tpu.matmul %5, %6, %cst {dimension_numbers = #tpu.dot_dimension_numbers<[1], [0], [0], [1], [0, 0, 1, 1], [], []>} : vector<64x12xf32>, vector<12x16xf32>, vector<64x16xf32> -> vector<64x16xf32>
    %c0_4 = arith.constant 0 : index
    %c0_5 = arith.constant 0 : index
    %8 = vector.load %arg3[%c0_4, %c0_5] : memref<1x16xf32, #tpu.memory_space<vmem>>, vector<1x16xf32>
    %9 = vector.broadcast %8 : vector<1x16xf32> to vector<64x16xf32>
    %10 = arith.addf %7, %9 : vector<64x16xf32>
    %cst_6 = arith.constant 0.000000e+00 : f32
    %11 = vector.broadcast %cst_6 : f32 to vector<64x16xf32>
    %12 = arith.maximumf %10, %11 : vector<64x16xf32>
    %13 = vector.shape_cast %12 : vector<64x16xf32> to vector<8x8x16xf32>
    %14 = vector.extract_strided_slice %13 {offsets = [0, 0, 0], sizes = [8, 8, 4], strides = [1, 1, 1]} : vector<8x8x16xf32> to vector<8x8x4xf32>
    %15 = vector.extract_strided_slice %13 {offsets = [0, 0, 4], sizes = [8, 8, 4], strides = [1, 1, 1]} : vector<8x8x16xf32> to vector<8x8x4xf32>
    %16 = arith.maximumf %14, %15 : vector<8x8x4xf32>
    %17 = vector.extract_strided_slice %13 {offsets = [0, 0, 8], sizes = [8, 8, 4], strides = [1, 1, 1]} : vector<8x8x16xf32> to vector<8x8x4xf32>
    %18 = vector.extract_strided_slice %13 {offsets = [0, 0, 12], sizes = [8, 8, 4], strides = [1, 1, 1]} : vector<8x8x16xf32> to vector<8x8x4xf32>
    %19 = arith.maximumf %17, %18 : vector<8x8x4xf32>
    %20 = tpu.concatenate %16, %19 in 2 : vector<8x8x4xf32>, vector<8x8x4xf32> -> vector<8x8x8xf32>
    %21 = vector.extract_strided_slice %20 {offsets = [0, 0, 0], sizes = [8, 1, 8], strides = [1, 1, 1]} : vector<8x8x8xf32> to vector<8x1x8xf32>
    %22 = vector.shape_cast %21 : vector<8x1x8xf32> to vector<8x8xf32>
    %23 = vector.extract_strided_slice %20 {offsets = [0, 1, 0], sizes = [8, 1, 8], strides = [1, 1, 1]} : vector<8x8x8xf32> to vector<8x1x8xf32>
    %24 = vector.shape_cast %23 : vector<8x1x8xf32> to vector<8x8xf32>
    %25 = arith.maximumf %22, %24 : vector<8x8xf32>
    %26 = vector.extract_strided_slice %20 {offsets = [0, 2, 0], sizes = [8, 1, 8], strides = [1, 1, 1]} : vector<8x8x8xf32> to vector<8x1x8xf32>
    %27 = vector.shape_cast %26 : vector<8x1x8xf32> to vector<8x8xf32>
    %28 = vector.extract_strided_slice %20 {offsets = [0, 3, 0], sizes = [8, 1, 8], strides = [1, 1, 1]} : vector<8x8x8xf32> to vector<8x1x8xf32>
    %29 = vector.shape_cast %28 : vector<8x1x8xf32> to vector<8x8xf32>
    %30 = arith.maximumf %27, %29 : vector<8x8xf32>
    %31 = vector.extract_strided_slice %20 {offsets = [0, 4, 0], sizes = [8, 1, 8], strides = [1, 1, 1]} : vector<8x8x8xf32> to vector<8x1x8xf32>
    %32 = vector.shape_cast %31 : vector<8x1x8xf32> to vector<8x8xf32>
    %33 = vector.extract_strided_slice %20 {offsets = [0, 5, 0], sizes = [8, 1, 8], strides = [1, 1, 1]} : vector<8x8x8xf32> to vector<8x1x8xf32>
    %34 = vector.shape_cast %33 : vector<8x1x8xf32> to vector<8x8xf32>
    %35 = arith.maximumf %32, %34 : vector<8x8xf32>
    %36 = vector.extract_strided_slice %20 {offsets = [0, 6, 0], sizes = [8, 1, 8], strides = [1, 1, 1]} : vector<8x8x8xf32> to vector<8x1x8xf32>
    %37 = vector.shape_cast %36 : vector<8x1x8xf32> to vector<8x8xf32>
    %38 = vector.extract_strided_slice %20 {offsets = [0, 7, 0], sizes = [8, 1, 8], strides = [1, 1, 1]} : vector<8x8x8xf32> to vector<8x1x8xf32>
    %39 = vector.shape_cast %38 : vector<8x1x8xf32> to vector<8x8xf32>
    %40 = arith.maximumf %37, %39 : vector<8x8xf32>
    %41 = tpu.concatenate %25, %30, %35, %40 in 1 : vector<8x8xf32>, vector<8x8xf32>, vector<8x8xf32>, vector<8x8xf32> -> vector<8x32xf32>
    %c0_7 = arith.constant 0 : index
    %c0_8 = arith.constant 0 : index
    %42 = vector.load %arg4[%c0_7, %c0_8] : memref<32x128xf32, #tpu.memory_space<vmem>>, vector<32x128xf32>
    %cst_9 = arith.constant dense<0.000000e+00> : vector<8x128xf32>
    %43 = tpu.matmul %41, %42, %cst_9 {dimension_numbers = #tpu.dot_dimension_numbers<[1], [0], [0], [1], [0, 0, 1, 1], [], []>} : vector<8x32xf32>, vector<32x128xf32>, vector<8x128xf32> -> vector<8x128xf32>
    %c0_10 = arith.constant 0 : index
    %c0_11 = arith.constant 0 : index
    %44 = vector.load %arg5[%c0_10, %c0_11] : memref<1x128xf32, #tpu.memory_space<vmem>>, vector<1x128xf32>
    %45 = vector.broadcast %44 : vector<1x128xf32> to vector<8x128xf32>
    %46 = arith.addf %43, %45 : vector<8x128xf32>
    %cst_12 = arith.constant 0.000000e+00 : f32
    %47 = vector.broadcast %cst_12 : f32 to vector<8x128xf32>
    %48 = arith.maximumf %46, %47 : vector<8x128xf32>
    %c0_13 = arith.constant 0 : index
    %c0_14 = arith.constant 0 : index
    %49 = vector.load %arg7[%c0_13, %c0_14] : memref<16x256xf32, #tpu.memory_space<vmem>>, vector<16x256xf32>
    %c0_15 = arith.constant 0 : index
    %c0_16 = arith.constant 0 : index
    %50 = vector.load %arg0[%c0_15, %c0_16] : memref<64x32xf32, #tpu.memory_space<vmem>>, vector<64x32xf32>
    %c0_17 = arith.constant 0 : index
    %c0_18 = arith.constant 0 : index
    %51 = vector.load %arg6[%c0_17, %c0_18] : memref<32x256xf32, #tpu.memory_space<vmem>>, vector<32x256xf32>
    %cst_19 = arith.constant dense<0.000000e+00> : vector<64x256xf32>
    %52 = tpu.matmul %50, %51, %cst_19 {dimension_numbers = #tpu.dot_dimension_numbers<[1], [0], [0], [1], [0, 0, 1, 1], [], []>} : vector<64x32xf32>, vector<32x256xf32>, vector<64x256xf32> -> vector<64x256xf32>
    %c0_20 = arith.constant 0 : index
    %c0_21 = arith.constant 0 : index
    %53 = vector.load %arg9[%c0_20, %c0_21] : memref<1x256xf32, #tpu.memory_space<vmem>>, vector<1x256xf32>
    %54 = vector.broadcast %53 : vector<1x256xf32> to vector<64x256xf32>
    %55 = arith.addf %52, %54 : vector<64x256xf32>
    %56 = vector.extract_strided_slice %48 {offsets = [0, 0], sizes = [8, 16], strides = [1, 1]} : vector<8x128xf32> to vector<8x16xf32>
    %cst_22 = arith.constant dense<0.000000e+00> : vector<8x256xf32>
    %57 = tpu.matmul %56, %49, %cst_22 {dimension_numbers = #tpu.dot_dimension_numbers<[1], [0], [0], [1], [0, 0, 1, 1], [], []>} : vector<8x16xf32>, vector<16x256xf32>, vector<8x256xf32> -> vector<8x256xf32>
    %58 = vector.extract_strided_slice %55 {offsets = [0, 0], sizes = [8, 256], strides = [1, 1]} : vector<64x256xf32> to vector<8x256xf32>
    %59 = arith.addf %58, %57 : vector<8x256xf32>
    %60 = vector.extract_strided_slice %48 {offsets = [0, 16], sizes = [8, 16], strides = [1, 1]} : vector<8x128xf32> to vector<8x16xf32>
    %cst_23 = arith.constant dense<0.000000e+00> : vector<8x256xf32>
    %61 = tpu.matmul %60, %49, %cst_23 {dimension_numbers = #tpu.dot_dimension_numbers<[1], [0], [0], [1], [0, 0, 1, 1], [], []>} : vector<8x16xf32>, vector<16x256xf32>, vector<8x256xf32> -> vector<8x256xf32>
    %62 = vector.extract_strided_slice %55 {offsets = [8, 0], sizes = [8, 256], strides = [1, 1]} : vector<64x256xf32> to vector<8x256xf32>
    %63 = arith.addf %62, %61 : vector<8x256xf32>
    %64 = vector.extract_strided_slice %48 {offsets = [0, 32], sizes = [8, 16], strides = [1, 1]} : vector<8x128xf32> to vector<8x16xf32>
    %cst_24 = arith.constant dense<0.000000e+00> : vector<8x256xf32>
    %65 = tpu.matmul %64, %49, %cst_24 {dimension_numbers = #tpu.dot_dimension_numbers<[1], [0], [0], [1], [0, 0, 1, 1], [], []>} : vector<8x16xf32>, vector<16x256xf32>, vector<8x256xf32> -> vector<8x256xf32>
    %66 = vector.extract_strided_slice %55 {offsets = [16, 0], sizes = [8, 256], strides = [1, 1]} : vector<64x256xf32> to vector<8x256xf32>
    %67 = arith.addf %66, %65 : vector<8x256xf32>
    %68 = vector.extract_strided_slice %48 {offsets = [0, 48], sizes = [8, 16], strides = [1, 1]} : vector<8x128xf32> to vector<8x16xf32>
    %cst_25 = arith.constant dense<0.000000e+00> : vector<8x256xf32>
    %69 = tpu.matmul %68, %49, %cst_25 {dimension_numbers = #tpu.dot_dimension_numbers<[1], [0], [0], [1], [0, 0, 1, 1], [], []>} : vector<8x16xf32>, vector<16x256xf32>, vector<8x256xf32> -> vector<8x256xf32>
    %70 = vector.extract_strided_slice %55 {offsets = [24, 0], sizes = [8, 256], strides = [1, 1]} : vector<64x256xf32> to vector<8x256xf32>
    %71 = arith.addf %70, %69 : vector<8x256xf32>
    %72 = vector.extract_strided_slice %48 {offsets = [0, 64], sizes = [8, 16], strides = [1, 1]} : vector<8x128xf32> to vector<8x16xf32>
    %cst_26 = arith.constant dense<0.000000e+00> : vector<8x256xf32>
    %73 = tpu.matmul %72, %49, %cst_26 {dimension_numbers = #tpu.dot_dimension_numbers<[1], [0], [0], [1], [0, 0, 1, 1], [], []>} : vector<8x16xf32>, vector<16x256xf32>, vector<8x256xf32> -> vector<8x256xf32>
    %74 = vector.extract_strided_slice %55 {offsets = [32, 0], sizes = [8, 256], strides = [1, 1]} : vector<64x256xf32> to vector<8x256xf32>
    %75 = arith.addf %74, %73 : vector<8x256xf32>
    %76 = vector.extract_strided_slice %48 {offsets = [0, 80], sizes = [8, 16], strides = [1, 1]} : vector<8x128xf32> to vector<8x16xf32>
    %cst_27 = arith.constant dense<0.000000e+00> : vector<8x256xf32>
    %77 = tpu.matmul %76, %49, %cst_27 {dimension_numbers = #tpu.dot_dimension_numbers<[1], [0], [0], [1], [0, 0, 1, 1], [], []>} : vector<8x16xf32>, vector<16x256xf32>, vector<8x256xf32> -> vector<8x256xf32>
    %78 = vector.extract_strided_slice %55 {offsets = [40, 0], sizes = [8, 256], strides = [1, 1]} : vector<64x256xf32> to vector<8x256xf32>
    %79 = arith.addf %78, %77 : vector<8x256xf32>
    %80 = vector.extract_strided_slice %48 {offsets = [0, 96], sizes = [8, 16], strides = [1, 1]} : vector<8x128xf32> to vector<8x16xf32>
    %cst_28 = arith.constant dense<0.000000e+00> : vector<8x256xf32>
    %81 = tpu.matmul %80, %49, %cst_28 {dimension_numbers = #tpu.dot_dimension_numbers<[1], [0], [0], [1], [0, 0, 1, 1], [], []>} : vector<8x16xf32>, vector<16x256xf32>, vector<8x256xf32> -> vector<8x256xf32>
    %82 = vector.extract_strided_slice %55 {offsets = [48, 0], sizes = [8, 256], strides = [1, 1]} : vector<64x256xf32> to vector<8x256xf32>
    %83 = arith.addf %82, %81 : vector<8x256xf32>
    %84 = vector.extract_strided_slice %48 {offsets = [0, 112], sizes = [8, 16], strides = [1, 1]} : vector<8x128xf32> to vector<8x16xf32>
    %cst_29 = arith.constant dense<0.000000e+00> : vector<8x256xf32>
    %85 = tpu.matmul %84, %49, %cst_29 {dimension_numbers = #tpu.dot_dimension_numbers<[1], [0], [0], [1], [0, 0, 1, 1], [], []>} : vector<8x16xf32>, vector<16x256xf32>, vector<8x256xf32> -> vector<8x256xf32>
    %86 = vector.extract_strided_slice %55 {offsets = [56, 0], sizes = [8, 256], strides = [1, 1]} : vector<64x256xf32> to vector<8x256xf32>
    %87 = arith.addf %86, %85 : vector<8x256xf32>
    %c0_30 = arith.constant 0 : index
    %c0_31 = arith.constant 0 : index
    %88 = vector.load %arg8[%c0_30, %c0_31] : memref<64x256xf32, #tpu.memory_space<vmem>>, vector<64x256xf32>
    %cst_32 = arith.constant 0.000000e+00 : f32
    %89 = vector.broadcast %cst_32 : f32 to vector<8x64xf32>
    %cst_33 = arith.constant 0.000000e+00 : f32
    %90 = vector.broadcast %cst_33 : f32 to vector<8x64xf32>
    %cst_34 = arith.constant 0.000000e+00 : f32
    %91 = vector.broadcast %cst_34 : f32 to vector<8x64xf32>
    %cst_35 = arith.constant dense<0.000000e+00> : vector<8x256xf32>
    %92 = tpu.matmul %89, %88, %cst_35 {dimension_numbers = #tpu.dot_dimension_numbers<[1], [0], [0], [1], [0, 0, 1, 1], [], []>} : vector<8x64xf32>, vector<64x256xf32>, vector<8x256xf32> -> vector<8x256xf32>
    %93 = arith.addf %59, %92 : vector<8x256xf32>
    %94 = vector.extract_strided_slice %93 {offsets = [0, 0], sizes = [8, 192], strides = [1, 1]} : vector<8x256xf32> to vector<8x192xf32>
    %95 = arith.negf %94 : vector<8x192xf32>
    %96 = math.exp %95 : vector<8x192xf32>
    %cst_36 = arith.constant 1.000000e+00 : f32
    %97 = vector.broadcast %cst_36 : f32 to vector<8x192xf32>
    %98 = arith.addf %97, %96 : vector<8x192xf32>
    %99 = arith.divf %97, %98 : vector<8x192xf32>
    %100 = vector.extract_strided_slice %93 {offsets = [0, 192], sizes = [8, 64], strides = [1, 1]} : vector<8x256xf32> to vector<8x64xf32>
    %101 = math.tanh %100 : vector<8x64xf32>
    %102 = vector.extract_strided_slice %99 {offsets = [0, 64], sizes = [8, 64], strides = [1, 1]} : vector<8x192xf32> to vector<8x64xf32>
    %103 = arith.mulf %102, %90 : vector<8x64xf32>
    %104 = vector.extract_strided_slice %99 {offsets = [0, 0], sizes = [8, 64], strides = [1, 1]} : vector<8x192xf32> to vector<8x64xf32>
    %105 = arith.mulf %104, %101 : vector<8x64xf32>
    %106 = arith.addf %103, %105 : vector<8x64xf32>
    %107 = vector.extract_strided_slice %99 {offsets = [0, 128], sizes = [8, 64], strides = [1, 1]} : vector<8x192xf32> to vector<8x64xf32>
    %108 = math.tanh %106 : vector<8x64xf32>
    %109 = arith.mulf %107, %108 : vector<8x64xf32>
    %110 = arith.addf %91, %109 : vector<8x64xf32>
    %cst_37 = arith.constant dense<0.000000e+00> : vector<8x256xf32>
    %111 = tpu.matmul %109, %88, %cst_37 {dimension_numbers = #tpu.dot_dimension_numbers<[1], [0], [0], [1], [0, 0, 1, 1], [], []>} : vector<8x64xf32>, vector<64x256xf32>, vector<8x256xf32> -> vector<8x256xf32>
    %112 = arith.addf %63, %111 : vector<8x256xf32>
    %113 = vector.extract_strided_slice %112 {offsets = [0, 0], sizes = [8, 192], strides = [1, 1]} : vector<8x256xf32> to vector<8x192xf32>
    %114 = arith.negf %113 : vector<8x192xf32>
    %115 = math.exp %114 : vector<8x192xf32>
    %cst_38 = arith.constant 1.000000e+00 : f32
    %116 = vector.broadcast %cst_38 : f32 to vector<8x192xf32>
    %117 = arith.addf %116, %115 : vector<8x192xf32>
    %118 = arith.divf %116, %117 : vector<8x192xf32>
    %119 = vector.extract_strided_slice %112 {offsets = [0, 192], sizes = [8, 64], strides = [1, 1]} : vector<8x256xf32> to vector<8x64xf32>
    %120 = math.tanh %119 : vector<8x64xf32>
    %121 = vector.extract_strided_slice %118 {offsets = [0, 64], sizes = [8, 64], strides = [1, 1]} : vector<8x192xf32> to vector<8x64xf32>
    %122 = arith.mulf %121, %106 : vector<8x64xf32>
    %123 = vector.extract_strided_slice %118 {offsets = [0, 0], sizes = [8, 64], strides = [1, 1]} : vector<8x192xf32> to vector<8x64xf32>
    %124 = arith.mulf %123, %120 : vector<8x64xf32>
    %125 = arith.addf %122, %124 : vector<8x64xf32>
    %126 = vector.extract_strided_slice %118 {offsets = [0, 128], sizes = [8, 64], strides = [1, 1]} : vector<8x192xf32> to vector<8x64xf32>
    %127 = math.tanh %125 : vector<8x64xf32>
    %128 = arith.mulf %126, %127 : vector<8x64xf32>
    %129 = arith.addf %110, %128 : vector<8x64xf32>
    %cst_39 = arith.constant dense<0.000000e+00> : vector<8x256xf32>
    %130 = tpu.matmul %128, %88, %cst_39 {dimension_numbers = #tpu.dot_dimension_numbers<[1], [0], [0], [1], [0, 0, 1, 1], [], []>} : vector<8x64xf32>, vector<64x256xf32>, vector<8x256xf32> -> vector<8x256xf32>
    %131 = arith.addf %67, %130 : vector<8x256xf32>
    %132 = vector.extract_strided_slice %131 {offsets = [0, 0], sizes = [8, 192], strides = [1, 1]} : vector<8x256xf32> to vector<8x192xf32>
    %133 = arith.negf %132 : vector<8x192xf32>
    %134 = math.exp %133 : vector<8x192xf32>
    %cst_40 = arith.constant 1.000000e+00 : f32
    %135 = vector.broadcast %cst_40 : f32 to vector<8x192xf32>
    %136 = arith.addf %135, %134 : vector<8x192xf32>
    %137 = arith.divf %135, %136 : vector<8x192xf32>
    %138 = vector.extract_strided_slice %131 {offsets = [0, 192], sizes = [8, 64], strides = [1, 1]} : vector<8x256xf32> to vector<8x64xf32>
    %139 = math.tanh %138 : vector<8x64xf32>
    %140 = vector.extract_strided_slice %137 {offsets = [0, 64], sizes = [8, 64], strides = [1, 1]} : vector<8x192xf32> to vector<8x64xf32>
    %141 = arith.mulf %140, %125 : vector<8x64xf32>
    %142 = vector.extract_strided_slice %137 {offsets = [0, 0], sizes = [8, 64], strides = [1, 1]} : vector<8x192xf32> to vector<8x64xf32>
    %143 = arith.mulf %142, %139 : vector<8x64xf32>
    %144 = arith.addf %141, %143 : vector<8x64xf32>
    %145 = vector.extract_strided_slice %137 {offsets = [0, 128], sizes = [8, 64], strides = [1, 1]} : vector<8x192xf32> to vector<8x64xf32>
    %146 = math.tanh %144 : vector<8x64xf32>
    %147 = arith.mulf %145, %146 : vector<8x64xf32>
    %148 = arith.addf %129, %147 : vector<8x64xf32>
    %cst_41 = arith.constant dense<0.000000e+00> : vector<8x256xf32>
    %149 = tpu.matmul %147, %88, %cst_41 {dimension_numbers = #tpu.dot_dimension_numbers<[1], [0], [0], [1], [0, 0, 1, 1], [], []>} : vector<8x64xf32>, vector<64x256xf32>, vector<8x256xf32> -> vector<8x256xf32>
    %150 = arith.addf %71, %149 : vector<8x256xf32>
    %151 = vector.extract_strided_slice %150 {offsets = [0, 0], sizes = [8, 192], strides = [1, 1]} : vector<8x256xf32> to vector<8x192xf32>
    %152 = arith.negf %151 : vector<8x192xf32>
    %153 = math.exp %152 : vector<8x192xf32>
    %cst_42 = arith.constant 1.000000e+00 : f32
    %154 = vector.broadcast %cst_42 : f32 to vector<8x192xf32>
    %155 = arith.addf %154, %153 : vector<8x192xf32>
    %156 = arith.divf %154, %155 : vector<8x192xf32>
    %157 = vector.extract_strided_slice %150 {offsets = [0, 192], sizes = [8, 64], strides = [1, 1]} : vector<8x256xf32> to vector<8x64xf32>
    %158 = math.tanh %157 : vector<8x64xf32>
    %159 = vector.extract_strided_slice %156 {offsets = [0, 64], sizes = [8, 64], strides = [1, 1]} : vector<8x192xf32> to vector<8x64xf32>
    %160 = arith.mulf %159, %144 : vector<8x64xf32>
    %161 = vector.extract_strided_slice %156 {offsets = [0, 0], sizes = [8, 64], strides = [1, 1]} : vector<8x192xf32> to vector<8x64xf32>
    %162 = arith.mulf %161, %158 : vector<8x64xf32>
    %163 = arith.addf %160, %162 : vector<8x64xf32>
    %164 = vector.extract_strided_slice %156 {offsets = [0, 128], sizes = [8, 64], strides = [1, 1]} : vector<8x192xf32> to vector<8x64xf32>
    %165 = math.tanh %163 : vector<8x64xf32>
    %166 = arith.mulf %164, %165 : vector<8x64xf32>
    %167 = arith.addf %148, %166 : vector<8x64xf32>
    %cst_43 = arith.constant dense<0.000000e+00> : vector<8x256xf32>
    %168 = tpu.matmul %166, %88, %cst_43 {dimension_numbers = #tpu.dot_dimension_numbers<[1], [0], [0], [1], [0, 0, 1, 1], [], []>} : vector<8x64xf32>, vector<64x256xf32>, vector<8x256xf32> -> vector<8x256xf32>
    %169 = arith.addf %75, %168 : vector<8x256xf32>
    %170 = vector.extract_strided_slice %169 {offsets = [0, 0], sizes = [8, 192], strides = [1, 1]} : vector<8x256xf32> to vector<8x192xf32>
    %171 = arith.negf %170 : vector<8x192xf32>
    %172 = math.exp %171 : vector<8x192xf32>
    %cst_44 = arith.constant 1.000000e+00 : f32
    %173 = vector.broadcast %cst_44 : f32 to vector<8x192xf32>
    %174 = arith.addf %173, %172 : vector<8x192xf32>
    %175 = arith.divf %173, %174 : vector<8x192xf32>
    %176 = vector.extract_strided_slice %169 {offsets = [0, 192], sizes = [8, 64], strides = [1, 1]} : vector<8x256xf32> to vector<8x64xf32>
    %177 = math.tanh %176 : vector<8x64xf32>
    %178 = vector.extract_strided_slice %175 {offsets = [0, 64], sizes = [8, 64], strides = [1, 1]} : vector<8x192xf32> to vector<8x64xf32>
    %179 = arith.mulf %178, %163 : vector<8x64xf32>
    %180 = vector.extract_strided_slice %175 {offsets = [0, 0], sizes = [8, 64], strides = [1, 1]} : vector<8x192xf32> to vector<8x64xf32>
    %181 = arith.mulf %180, %177 : vector<8x64xf32>
    %182 = arith.addf %179, %181 : vector<8x64xf32>
    %183 = vector.extract_strided_slice %175 {offsets = [0, 128], sizes = [8, 64], strides = [1, 1]} : vector<8x192xf32> to vector<8x64xf32>
    %184 = math.tanh %182 : vector<8x64xf32>
    %185 = arith.mulf %183, %184 : vector<8x64xf32>
    %186 = arith.addf %167, %185 : vector<8x64xf32>
    %cst_45 = arith.constant dense<0.000000e+00> : vector<8x256xf32>
    %187 = tpu.matmul %185, %88, %cst_45 {dimension_numbers = #tpu.dot_dimension_numbers<[1], [0], [0], [1], [0, 0, 1, 1], [], []>} : vector<8x64xf32>, vector<64x256xf32>, vector<8x256xf32> -> vector<8x256xf32>
    %188 = arith.addf %79, %187 : vector<8x256xf32>
    %189 = vector.extract_strided_slice %188 {offsets = [0, 0], sizes = [8, 192], strides = [1, 1]} : vector<8x256xf32> to vector<8x192xf32>
    %190 = arith.negf %189 : vector<8x192xf32>
    %191 = math.exp %190 : vector<8x192xf32>
    %cst_46 = arith.constant 1.000000e+00 : f32
    %192 = vector.broadcast %cst_46 : f32 to vector<8x192xf32>
    %193 = arith.addf %192, %191 : vector<8x192xf32>
    %194 = arith.divf %192, %193 : vector<8x192xf32>
    %195 = vector.extract_strided_slice %188 {offsets = [0, 192], sizes = [8, 64], strides = [1, 1]} : vector<8x256xf32> to vector<8x64xf32>
    %196 = math.tanh %195 : vector<8x64xf32>
    %197 = vector.extract_strided_slice %194 {offsets = [0, 64], sizes = [8, 64], strides = [1, 1]} : vector<8x192xf32> to vector<8x64xf32>
    %198 = arith.mulf %197, %182 : vector<8x64xf32>
    %199 = vector.extract_strided_slice %194 {offsets = [0, 0], sizes = [8, 64], strides = [1, 1]} : vector<8x192xf32> to vector<8x64xf32>
    %200 = arith.mulf %199, %196 : vector<8x64xf32>
    %201 = arith.addf %198, %200 : vector<8x64xf32>
    %202 = vector.extract_strided_slice %194 {offsets = [0, 128], sizes = [8, 64], strides = [1, 1]} : vector<8x192xf32> to vector<8x64xf32>
    %203 = math.tanh %201 : vector<8x64xf32>
    %204 = arith.mulf %202, %203 : vector<8x64xf32>
    %205 = arith.addf %186, %204 : vector<8x64xf32>
    %cst_47 = arith.constant dense<0.000000e+00> : vector<8x256xf32>
    %206 = tpu.matmul %204, %88, %cst_47 {dimension_numbers = #tpu.dot_dimension_numbers<[1], [0], [0], [1], [0, 0, 1, 1], [], []>} : vector<8x64xf32>, vector<64x256xf32>, vector<8x256xf32> -> vector<8x256xf32>
    %207 = arith.addf %83, %206 : vector<8x256xf32>
    %208 = vector.extract_strided_slice %207 {offsets = [0, 0], sizes = [8, 192], strides = [1, 1]} : vector<8x256xf32> to vector<8x192xf32>
    %209 = arith.negf %208 : vector<8x192xf32>
    %210 = math.exp %209 : vector<8x192xf32>
    %cst_48 = arith.constant 1.000000e+00 : f32
    %211 = vector.broadcast %cst_48 : f32 to vector<8x192xf32>
    %212 = arith.addf %211, %210 : vector<8x192xf32>
    %213 = arith.divf %211, %212 : vector<8x192xf32>
    %214 = vector.extract_strided_slice %207 {offsets = [0, 192], sizes = [8, 64], strides = [1, 1]} : vector<8x256xf32> to vector<8x64xf32>
    %215 = math.tanh %214 : vector<8x64xf32>
    %216 = vector.extract_strided_slice %213 {offsets = [0, 64], sizes = [8, 64], strides = [1, 1]} : vector<8x192xf32> to vector<8x64xf32>
    %217 = arith.mulf %216, %201 : vector<8x64xf32>
    %218 = vector.extract_strided_slice %213 {offsets = [0, 0], sizes = [8, 64], strides = [1, 1]} : vector<8x192xf32> to vector<8x64xf32>
    %219 = arith.mulf %218, %215 : vector<8x64xf32>
    %220 = arith.addf %217, %219 : vector<8x64xf32>
    %221 = vector.extract_strided_slice %213 {offsets = [0, 128], sizes = [8, 64], strides = [1, 1]} : vector<8x192xf32> to vector<8x64xf32>
    %222 = math.tanh %220 : vector<8x64xf32>
    %223 = arith.mulf %221, %222 : vector<8x64xf32>
    %224 = arith.addf %205, %223 : vector<8x64xf32>
    %cst_49 = arith.constant dense<0.000000e+00> : vector<8x256xf32>
    %225 = tpu.matmul %223, %88, %cst_49 {dimension_numbers = #tpu.dot_dimension_numbers<[1], [0], [0], [1], [0, 0, 1, 1], [], []>} : vector<8x64xf32>, vector<64x256xf32>, vector<8x256xf32> -> vector<8x256xf32>
    %226 = arith.addf %87, %225 : vector<8x256xf32>
    %227 = vector.extract_strided_slice %226 {offsets = [0, 0], sizes = [8, 192], strides = [1, 1]} : vector<8x256xf32> to vector<8x192xf32>
    %228 = arith.negf %227 : vector<8x192xf32>
    %229 = math.exp %228 : vector<8x192xf32>
    %cst_50 = arith.constant 1.000000e+00 : f32
    %230 = vector.broadcast %cst_50 : f32 to vector<8x192xf32>
    %231 = arith.addf %230, %229 : vector<8x192xf32>
    %232 = arith.divf %230, %231 : vector<8x192xf32>
    %233 = vector.extract_strided_slice %226 {offsets = [0, 192], sizes = [8, 64], strides = [1, 1]} : vector<8x256xf32> to vector<8x64xf32>
    %234 = math.tanh %233 : vector<8x64xf32>
    %235 = vector.extract_strided_slice %232 {offsets = [0, 64], sizes = [8, 64], strides = [1, 1]} : vector<8x192xf32> to vector<8x64xf32>
    %236 = arith.mulf %235, %220 : vector<8x64xf32>
    %237 = vector.extract_strided_slice %232 {offsets = [0, 0], sizes = [8, 64], strides = [1, 1]} : vector<8x192xf32> to vector<8x64xf32>
    %238 = arith.mulf %237, %234 : vector<8x64xf32>
    %239 = arith.addf %236, %238 : vector<8x64xf32>
    %240 = vector.extract_strided_slice %232 {offsets = [0, 128], sizes = [8, 64], strides = [1, 1]} : vector<8x192xf32> to vector<8x64xf32>
    %241 = math.tanh %239 : vector<8x64xf32>
    %242 = arith.mulf %240, %241 : vector<8x64xf32>
    %243 = arith.addf %224, %242 : vector<8x64xf32>
    %c0_51 = arith.constant 0 : index
    %c0_52 = arith.constant 0 : index
    %244 = vector.load %arg10[%c0_51, %c0_52] : memref<1x64xf32, #tpu.memory_space<vmem>>, vector<1x64xf32>
    %245 = vector.broadcast %244 : vector<1x64xf32> to vector<8x64xf32>
    %246 = arith.mulf %243, %245 : vector<8x64xf32>
    %247 = vector.extract_strided_slice %246 {offsets = [0, 0], sizes = [8, 32], strides = [1, 1]} : vector<8x64xf32> to vector<8x32xf32>
    %cst_53 = arith.constant dense<0.000000e+00> : vector<8xf32>
    %248 = vector.multi_reduction <add>, %247, %cst_53 [1] : vector<8x32xf32> to vector<8xf32>
    %249 = vector.shape_cast %248 : vector<8xf32> to vector<8x1xf32>
    %250 = vector.extract_strided_slice %246 {offsets = [0, 32], sizes = [8, 32], strides = [1, 1]} : vector<8x64xf32> to vector<8x32xf32>
    %cst_54 = arith.constant dense<0.000000e+00> : vector<8xf32>
    %251 = vector.multi_reduction <add>, %250, %cst_54 [1] : vector<8x32xf32> to vector<8xf32>
    %252 = vector.shape_cast %251 : vector<8xf32> to vector<8x1xf32>
    %253 = arith.negf %249 : vector<8x1xf32>
    %254 = math.exp %253 : vector<8x1xf32>
    %cst_55 = arith.constant 1.000000e+00 : f32
    %255 = vector.broadcast %cst_55 : f32 to vector<8x1xf32>
    %256 = arith.addf %255, %254 : vector<8x1xf32>
    %257 = arith.divf %255, %256 : vector<8x1xf32>
    %258 = arith.negf %252 : vector<8x1xf32>
    %259 = math.exp %258 : vector<8x1xf32>
    %cst_56 = arith.constant 1.000000e+00 : f32
    %260 = vector.broadcast %cst_56 : f32 to vector<8x1xf32>
    %261 = arith.addf %260, %259 : vector<8x1xf32>
    %262 = arith.divf %260, %261 : vector<8x1xf32>
    %263 = arith.addf %257, %262 : vector<8x1xf32>
    %cst_57 = arith.constant 5.000000e-01 : f32
    %264 = vector.broadcast %cst_57 : f32 to vector<8x1xf32>
    %265 = arith.mulf %264, %263 : vector<8x1xf32>
    %266 = vector.extract_strided_slice %265 {offsets = [0, 0], sizes = [2, 1], strides = [1, 1]} : vector<8x1xf32> to vector<2x1xf32>
    %c0_58 = arith.constant 0 : index
    %c0_59 = arith.constant 0 : index
    %267 = vector.load %arg11[%c0_58, %c0_59] : memref<2x1xf32, #tpu.memory_space<vmem>>, vector<2x1xf32>
    tpu.vector_store %arg11[%c0_58, %c0_59], %266 {strides = array<i32>} : memref<2x1xf32, #tpu.memory_space<vmem>>, vector<2x1xf32>,
    return
  }
}

</mosaic_0001>

<llo_original>
// kernel: lscnn_forward.1
$region0: #{lscnn_forward.1}
  #allocation0 [shape = 'u32[]', space=smem, size = 0x4, offset = 0x4, fixed_abs, tag = 'smem constant byte address 0x4 - core index']
  #allocation1 [shape = 'u32[144,128]{1,0:T(1,128)}', space=vmem, size = 0x12000, scoped, tag = 'internal scratch']
  %s0 = inlined_call_operand.vmem [shape: f32[64,32], index: 0, kind: input, shape index: {}]
  %s1 = inlined_call_operand.vmem [shape: f32[8,10,4], index: 1, kind: input, shape index: {}]
  %s2 = inlined_call_operand.vmem [shape: f32[12,16], index: 2, kind: input, shape index: {}]
  %s3 = inlined_call_operand.vmem [shape: f32[1,16], index: 3, kind: input, shape index: {}]
  %s4 = inlined_call_operand.vmem [shape: f32[32,128], index: 4, kind: input, shape index: {}]
  %s5 = inlined_call_operand.vmem [shape: f32[1,128], index: 5, kind: input, shape index: {}]
  %s6 = inlined_call_operand.vmem [shape: f32[32,256], index: 6, kind: input, shape index: {}]
  %s7 = inlined_call_operand.vmem [shape: f32[16,256], index: 7, kind: input, shape index: {}]
  %s8 = inlined_call_operand.vmem [shape: f32[64,256], index: 8, kind: input, shape index: {}]
  %s9 = inlined_call_operand.vmem [shape: f32[1,256], index: 9, kind: input, shape index: {}]
  %s10 = inlined_call_operand.vmem [shape: f32[1,64], index: 10, kind: input, shape index: {}]
  %s11 = inlined_call_operand.vmem [shape: f32[2,1], index: 11, kind: output, shape index: {}]
  %s12 = sld [smem:[#allocation0]]
  $region54: #{lscnn_forward.1} parent=0
    _
  %s14 = ssub.s32 1, %s12
  %s15 = scalar_select 0, %s14, %s12
  // Predicated region
  $region2: #{lscnn_forward.1} parent=0 // pred_check
    _
  $region3: #{lscnn_forward.1} parent=0 // pred_check_branch
    %17 = sbr.rel (0) target = $region5
  $region4: #{lscnn_forward.1} parent=0 // pred_region
    _
  $region5: #{lscnn_forward.1} parent=0 // pred_fallthru
    _
  // Predicated region
  $region6: #{lscnn_forward.1} parent=0 // pred_check
    _
  $region7: #{lscnn_forward.1} parent=0 // pred_check_branch
    %19 = sbr.rel (0) target = $region9
  $region8: #{lscnn_forward.1} parent=0 // pred_region
    _
  $region9: #{lscnn_forward.1} parent=0 // pred_fallthru
    _
  // Predicated region
  $region10: #{lscnn_forward.1} parent=0 // pred_check
    _
  $region11: #{lscnn_forward.1} parent=0 // pred_check_branch
    %21 = sbr.rel (0) target = $region13
  $region12: #{lscnn_forward.1} parent=0 // pred_region
    _
  $region13: #{lscnn_forward.1} parent=0 // pred_fallthru
    _
  // Predicated region
  $region14: #{lscnn_forward.1} parent=0 // pred_check
    _
  $region15: #{lscnn_forward.1} parent=0 // pred_check_branch
    %23 = sbr.rel (0) target = $region17
  $region16: #{lscnn_forward.1} parent=0 // pred_region
    _
  $region17: #{lscnn_forward.1} parent=0 // pred_fallthru
    _
  // Predicated region
  $region18: #{lscnn_forward.1} parent=0 // pred_check
    _
  $region19: #{lscnn_forward.1} parent=0 // pred_check_branch
    %25 = sbr.rel (0) target = $region21
  $region20: #{lscnn_forward.1} parent=0 // pred_region
    _
  $region21: #{lscnn_forward.1} parent=0 // pred_fallthru
    _
  // Predicated region
  $region22: #{lscnn_forward.1} parent=0 // pred_check
    _
  $region23: #{lscnn_forward.1} parent=0 // pred_check_branch
    %27 = sbr.rel (0) target = $region25
  $region24: #{lscnn_forward.1} parent=0 // pred_region
    _
  $region25: #{lscnn_forward.1} parent=0 // pred_fallthru
    _
  // Predicated region
  $region26: #{lscnn_forward.1} parent=0 // pred_check
    _
  $region27: #{lscnn_forward.1} parent=0 // pred_check_branch
    %29 = sbr.rel (0) target = $region29
  $region28: #{lscnn_forward.1} parent=0 // pred_region
    _
  $region29: #{lscnn_forward.1} parent=0 // pred_fallthru
    _
  // Predicated region
  $region30: #{lscnn_forward.1} parent=0 // pred_check
    _
  $region31: #{lscnn_forward.1} parent=0 // pred_check_branch
    %31 = sbr.rel (0) target = $region33
  $region32: #{lscnn_forward.1} parent=0 // pred_region
    _
  $region33: #{lscnn_forward.1} parent=0 // pred_fallthru
    _
  // Predicated region
  $region34: #{lscnn_forward.1} parent=0 // pred_check
    _
  $region35: #{lscnn_forward.1} parent=0 // pred_check_branch
    %33 = sbr.rel (0) target = $region37
  $region36: #{lscnn_forward.1} parent=0 // pred_region
    _
  $region37: #{lscnn_forward.1} parent=0 // pred_fallthru
    _
  // Predicated region
  $region38: #{lscnn_forward.1} parent=0 // pred_check
    _
  $region39: #{lscnn_forward.1} parent=0 // pred_check_branch
    %35 = sbr.rel (0) target = $region41
  $region40: #{lscnn_forward.1} parent=0 // pred_region
    _
  $region41: #{lscnn_forward.1} parent=0 // pred_fallthru
    _
  // Predicated region
  $region42: #{lscnn_forward.1} parent=0 // pred_check
    _
  $region43: #{lscnn_forward.1} parent=0 // pred_check_branch
    %37 = sbr.rel (0) target = $region45
  $region44: #{lscnn_forward.1} parent=0 // pred_region
    _
  $region45: #{lscnn_forward.1} parent=0 // pred_fallthru
    _
  %v38 = vld [vmem:[%s1] sm:$0xff]
  %v39 = vld [vmem:[%s1 + $0x8] sm:$0x3]
  %v40 = vld [vmem:[%s1 + $0x10] sm:$0xff]
  %v41 = vld [vmem:[%s1 + $0x18] sm:$0x3]
  %v42 = vld [vmem:[%s1 + $0x20] sm:$0xff]
  %v43 = vld [vmem:[%s1 + $0x28] sm:$0x3]
  %v44 = vld [vmem:[%s1 + $0x30] sm:$0xff]
  %v45 = vld [vmem:[%s1 + $0x38] sm:$0x3]
  %v46 = vld [vmem:[%s1 + $0x40] sm:$0xff]
  %v47 = vld [vmem:[%s1 + $0x48] sm:$0x3]
  %v48 = vld [vmem:[%s1 + $0x50] sm:$0xff]
  %v49 = vld [vmem:[%s1 + $0x58] sm:$0x3]
  %v50 = vld [vmem:[%s1 + $0x60] sm:$0xff]
  %v51 = vld [vmem:[%s1 + $0x68] sm:$0x3]
  %v52 = vld [vmem:[%s1 + $0x70] sm:$0xff]
  %v53 = vld [vmem:[%s1 + $0x78] sm:$0x3]
  %vm70 = vcmask 1046528
  %v71 = vrot.slane %v38, 1
  %v72 = vrot.slane %v39, 1
  %v73 = vsel %vm70, %v71, %v72
  %v74 = vrot.slane %v40, 1
  %v75 = vrot.slane %v41, 1
  %v76 = vsel %vm70, %v74, %v75
  %v77 = vrot.slane %v42, 1
  %v78 = vrot.slane %v43, 1
  %v79 = vsel %vm70, %v77, %v78
  %v80 = vrot.slane %v44, 1
  %v81 = vrot.slane %v45, 1
  %v82 = vsel %vm70, %v80, %v81
  %v83 = vrot.slane %v46, 1
  %v84 = vrot.slane %v47, 1
  %v85 = vsel %vm70, %v83, %v84
  %v86 = vrot.slane %v48, 1
  %v87 = vrot.slane %v49, 1
  %v88 = vsel %vm70, %v86, %v87
  %v89 = vrot.slane %v50, 1
  %v90 = vrot.slane %v51, 1
  %v91 = vsel %vm70, %v89, %v90
  %v92 = vrot.slane %v52, 1
  %v93 = vrot.slane %v53, 1
  %v94 = vsel %vm70, %v92, %v93
  %95 = vrot.lane.b32.xlu0 %v73, 4
  %v96 = vpop.permute.xlu0 %95
  %97 = vrot.lane.b32.xlu0 %v76, 4
  %v98 = vpop.permute.xlu0 %97
  %99 = vrot.lane.b32.xlu0 %v79, 4
  %v100 = vpop.permute.xlu0 %99
  %101 = vrot.lane.b32.xlu0 %v82, 4
  %v102 = vpop.permute.xlu0 %101
  %103 = vrot.lane.b32.xlu0 %v85, 4
  %v104 = vpop.permute.xlu0 %103
  %105 = vrot.lane.b32.xlu0 %v88, 4
  %v106 = vpop.permute.xlu0 %105
  %107 = vrot.lane.b32.xlu0 %v91, 4
  %v108 = vpop.permute.xlu0 %107
  %109 = vrot.lane.b32.xlu0 %v94, 4
  %v110 = vpop.permute.xlu0 %109
  %vm119 = vcmask 1045504
  %v120 = vrot.slane %v38, 2
  %v121 = vrot.slane %v39, 2
  %v122 = vsel %vm119, %v120, %v121
  %v123 = vrot.slane %v40, 2
  %v124 = vrot.slane %v41, 2
  %v125 = vsel %vm119, %v123, %v124
  %v126 = vrot.slane %v42, 2
  %v127 = vrot.slane %v43, 2
  %v128 = vsel %vm119, %v126, %v127
  %v129 = vrot.slane %v44, 2
  %v130 = vrot.slane %v45, 2
  %v131 = vsel %vm119, %v129, %v130
  %v132 = vrot.slane %v46, 2
  %v133 = vrot.slane %v47, 2
  %v134 = vsel %vm119, %v132, %v133
  %v135 = vrot.slane %v48, 2
  %v136 = vrot.slane %v49, 2
  %v137 = vsel %vm119, %v135, %v136
  %v138 = vrot.slane %v50, 2
  %v139 = vrot.slane %v51, 2
  %v140 = vsel %vm119, %v138, %v139
  %v141 = vrot.slane %v52, 2
  %v142 = vrot.slane %v53, 2
  %v143 = vsel %vm119, %v141, %v142
  %144 = vrot.lane.b32.xlu0 %v122, 8
  %v145 = vpop.permute.xlu0 %144
  %146 = vrot.lane.b32.xlu0 %v125, 8
  %v147 = vpop.permute.xlu0 %146
  %148 = vrot.lane.b32.xlu0 %v128, 8
  %v149 = vpop.permute.xlu0 %148
  %150 = vrot.lane.b32.xlu0 %v131, 8
  %v151 = vpop.permute.xlu0 %150
  %152 = vrot.lane.b32.xlu0 %v134, 8
  %v153 = vpop.permute.xlu0 %152
  %154 = vrot.lane.b32.xlu0 %v137, 8
  %v155 = vpop.permute.xlu0 %154
  %156 = vrot.lane.b32.xlu0 %v140, 8
  %v157 = vpop.permute.xlu0 %156
  %158 = vrot.lane.b32.xlu0 %v143, 8
  %v159 = vpop.permute.xlu0 %158
  %vm168 = vcmask 31744
  %v169 = vsel %vm168, %v38, %v96
  %v170 = vsel %vm168, %v40, %v98
  %v171 = vsel %vm168, %v42, %v100
  %v172 = vsel %vm168, %v44, %v102
  %v173 = vsel %vm168, %v46, %v104
  %v174 = vsel %vm168, %v48, %v106
  %v175 = vsel %vm168, %v50, %v108
  %v176 = vsel %vm168, %v52, %v110
  %vm177 = vcmask 64512
  %v178 = vsel %vm177, %v169, %v145
  %v179 = vsel %vm177, %v170, %v147
  %v180 = vsel %vm177, %v171, %v149
  %v181 = vsel %vm177, %v172, %v151
  %v182 = vsel %vm177, %v173, %v153
  %v183 = vsel %vm177, %v174, %v155
  %v184 = vsel %vm177, %v175, %v157
  %v185 = vsel %vm177, %v176, %v159
  %v186 = vld [vmem:[%s2] sm:$0xff]
  %v187 = vld [vmem:[%s2 + $0x8] sm:$0xf]
  %v188 = vld [vmem:[%s3] sm:$0x1]
  %v190 = vlaneseq
  %v191 = vshrl.u32 %v190, 7
  %v192 = vsub.s32 0, %v191
  %v193 = vrot.slane %v188, %v192
  %vm195 = vcmask 97280
  %v197 = vsel %vm195, %v178, 0
  %v200 = vsel %vm195, %v179, 0
  %v203 = vsel %vm195, %v180, 0
  %v206 = vsel %vm195, %v181, 0
  %v209 = vsel %vm195, %v182, 0
  %v212 = vsel %vm195, %v183, 0
  %v215 = vsel %vm195, %v184, 0
  %v218 = vsel %vm195, %v185, 0
  %vm220 = vcmask 1043456
  %v222 = vsel %vm220, %v187, 0
  %224 = vmatprep.subr.mxu0 0.0
  %225 = vmatpush1.msra.mxu0 0.0
  %226 = vmatprep.subr.mxu0 0.0
  %227 = vmatpush1.msra.mxu0 0.0
  %228 = vmatprep.subr.mxu0 0.0
  %229 = vmatpush1.msra.mxu0 0.0
  %230 = vmatprep.subr.mxu0 0.0
  %231 = vmatpush1.msra.mxu0 0.0
  %232 = vmatprep.subr.mxu0 0.0
  %233 = vmatpush1.msra.mxu0 0.0
  %234 = vmatprep.subr.mxu0 0.0
  %235 = vmatpush1.msra.mxu0 0.0
  %236 = vmatprep.subr.mxu0 0.0
  %237 = vmatpush1.msra.mxu0 0.0
  %238 = vmatprep.subr.mxu0 0.0
  %239 = vmatpush1.msra.mxu0 0.0
  %240 = vmatprep.subr.mxu0 0.0
  %241 = vmatpush1.msra.mxu0 0.0
  %242 = vmatprep.subr.mxu0 0.0
  %243 = vmatpush1.msra.mxu0 0.0
  %244 = vmatprep.subr.mxu0 0.0
  %245 = vmatpush1.msra.mxu0 0.0
  %246 = vmatprep.subr.mxu0 0.0
  %247 = vmatpush1.msra.mxu0 0.0
  %248 = vmatprep.subr.mxu0 0.0
  %249 = vmatpush1.msra.mxu0 0.0
  %250 = vmatprep.subr.mxu0 0.0
  %251 = vmatpush1.msra.mxu0 0.0
  %252 = vmatprep.subr.mxu0 0.0
  %253 = vmatpush1.msra.mxu0 %v222
  %254 = vmatprep.subr.mxu0 0.0
  %255 = vmatpush1.msra.mxu0 %v186
  %256 = vmatprep.subr.mxu0 0.0
  %257 = vmatpush2.msra.mxu0 0.0
  %258 = vmatprep.subr.mxu0 0.0
  %259 = vmatpush2.msra.mxu0 0.0
  %260 = vmatprep.subr.mxu0 0.0
  %261 = vmatpush2.msra.mxu0 0.0
  %262 = vmatprep.subr.mxu0 0.0
  %263 = vmatpush2.msra.mxu0 0.0
  %264 = vmatprep.subr.mxu0 0.0
  %265 = vmatpush2.msra.mxu0 0.0
  %266 = vmatprep.subr.mxu0 0.0
  %267 = vmatpush2.msra.mxu0 0.0
  %268 = vmatprep.subr.mxu0 0.0
  %269 = vmatpush2.msra.mxu0 0.0
  %270 = vmatprep.subr.mxu0 0.0
  %271 = vmatpush2.msra.mxu0 0.0
  %272 = vmatprep.subr.mxu0 0.0
  %273 = vmatpush2.msra.mxu0 0.0
  %274 = vmatprep.subr.mxu0 0.0
  %275 = vmatpush2.msra.mxu0 0.0
  %276 = vmatprep.subr.mxu0 0.0
  %277 = vmatpush2.msra.mxu0 0.0
  %278 = vmatprep.subr.mxu0 0.0
  %279 = vmatpush2.msra.mxu0 0.0
  %280 = vmatprep.subr.mxu0 0.0
  %281 = vmatpush2.msra.mxu0 0.0
  %282 = vmatprep.subr.mxu0 0.0
  %283 = vmatpush2.msra.mxu0 0.0
  %284 = vmatprep.subr.mxu0 0.0
  %285 = vmatpush2.msra.mxu0 0.0
  %286 = vmatprep.subr.mxu0 0.0
  %287 = vmatpush2.msra.mxu0 0.0
  %288 = vmatprep.mubr.f32.mxu0 0.0
  %289 = vmatmul.mubr.f32.gmra.mxu0 %v197
  %v290 = vpop.f32.mrf.mxu0
  %v291 = vadd.f32 %v193, %v290
  %v292 = vpop.f32.mrf.mxu0
  %293 = vmatprep.mubr.f32.mxu0 0.0
  %294 = vmatmul.mubr.f32.gmra.mxu0 %v200
  %v295 = vpop.f32.mrf.mxu0
  %v296 = vadd.f32 %v193, %v295
  %v297 = vpop.f32.mrf.mxu0
  %298 = vmatprep.mubr.f32.mxu0 0.0
  %299 = vmatmul.mubr.f32.gmra.mxu0 %v203
  %v300 = vpop.f32.mrf.mxu0
  %v301 = vadd.f32 %v193, %v300
  %v302 = vpop.f32.mrf.mxu0
  %303 = vmatprep.mubr.f32.mxu0 0.0
  %304 = vmatmul.mubr.f32.gmra.mxu0 %v206
  %v305 = vpop.f32.mrf.mxu0
  %v306 = vadd.f32 %v193, %v305
  %v307 = vpop.f32.mrf.mxu0
  %308 = vmatprep.mubr.f32.mxu0 0.0
  %309 = vmatmul.mubr.f32.gmra.mxu0 %v209
  %v310 = vpop.f32.mrf.mxu0
  %v311 = vadd.f32 %v193, %v310
  %v312 = vpop.f32.mrf.mxu0
  %313 = vmatprep.mubr.f32.mxu0 0.0
  %314 = vmatmul.mubr.f32.gmra.mxu0 %v212
  %v315 = vpop.f32.mrf.mxu0
  %v316 = vadd.f32 %v193, %v315
  %v317 = vpop.f32.mrf.mxu0
  %318 = vmatprep.mubr.f32.mxu0 0.0
  %319 = vmatmul.mubr.f32.gmra.mxu0 %v215
  %v320 = vpop.f32.mrf.mxu0
  %v321 = vadd.f32 %v193, %v320
  %v322 = vpop.f32.mrf.mxu0
  %323 = vmatprep.mubr.f32.mxu0 0.0
  %324 = vmatmul.mubr.f32.gmra.mxu0 %v218
  %v325 = vpop.f32.mrf.mxu0
  %v326 = vadd.f32 %v193, %v325
  %v327 = vpop.f32.mrf.mxu0
  %328 = vdwg.mxu0
  %v329 = vmax.f32 %v291, 0.0
  %v330 = vmax.f32 %v296, 0.0
  %v331 = vmax.f32 %v301, 0.0
  %v332 = vmax.f32 %v306, 0.0
  %v333 = vmax.f32 %v311, 0.0
  %v334 = vmax.f32 %v316, 0.0
  %v335 = vmax.f32 %v321, 0.0
  %v336 = vmax.f32 %v326, 0.0
  %345 = vrot.lane.b32.xlu0 %v329, 124
  %v346 = vpop.permute.xlu0 %345
  %347 = vrot.lane.b32.xlu0 %v330, 124
  %v348 = vpop.permute.xlu0 %347
  %349 = vrot.lane.b32.xlu0 %v331, 124
  %v350 = vpop.permute.xlu0 %349
  %351 = vrot.lane.b32.xlu0 %v332, 124
  %v352 = vpop.permute.xlu0 %351
  %353 = vrot.lane.b32.xlu0 %v333, 124
  %v354 = vpop.permute.xlu0 %353
  %355 = vrot.lane.b32.xlu0 %v334, 124
  %v356 = vpop.permute.xlu0 %355
  %357 = vrot.lane.b32.xlu0 %v335, 124
  %v358 = vpop.permute.xlu0 %357
  %359 = vrot.lane.b32.xlu0 %v336, 124
  %v360 = vpop.permute.xlu0 %359
  %v369 = vmax.f32 %v329, %v346
  %v370 = vmax.f32 %v330, %v348
  %v371 = vmax.f32 %v331, %v350
  %v372 = vmax.f32 %v332, %v352
  %v373 = vmax.f32 %v333, %v354
  %v374 = vmax.f32 %v334, %v356
  %v375 = vmax.f32 %v335, %v358
  %v376 = vmax.f32 %v336, %v360
  %385 = vrot.lane.b32.xlu0 %v369, 124
  %v386 = vpop.permute.xlu0 %385
  %387 = vrot.lane.b32.xlu0 %v370, 124
  %v388 = vpop.permute.xlu0 %387
  %389 = vrot.lane.b32.xlu0 %v371, 124
  %v390 = vpop.permute.xlu0 %389
  %391 = vrot.lane.b32.xlu0 %v372, 124
  %v392 = vpop.permute.xlu0 %391
  %393 = vrot.lane.b32.xlu0 %v373, 124
  %v394 = vpop.permute.xlu0 %393
  %395 = vrot.lane.b32.xlu0 %v374, 124
  %v396 = vpop.permute.xlu0 %395
  %397 = vrot.lane.b32.xlu0 %v375, 124
  %v398 = vpop.permute.xlu0 %397
  %399 = vrot.lane.b32.xlu0 %v376, 124
  %v400 = vpop.permute.xlu0 %399
  %v409 = vsel %vm168, %v369, %v386
  %v410 = vsel %vm168, %v370, %v388
  %v411 = vsel %vm168, %v371, %v390
  %v412 = vsel %vm168, %v372, %v392
  %v413 = vsel %vm168, %v373, %v394
  %v414 = vsel %vm168, %v374, %v396
  %v415 = vsel %vm168, %v375, %v398
  %v416 = vsel %vm168, %v376, %v400
  %v425 = vrot.slane %v409, 1
  %v426 = vrot.slane %v410, 1
  %v427 = vrot.slane %v411, 1
  %v428 = vrot.slane %v412, 1
  %v429 = vrot.slane %v413, 1
  %v430 = vrot.slane %v414, 1
  %v431 = vrot.slane %v415, 1
  %v432 = vrot.slane %v416, 1
  %v441 = vmax.f32 %v409, %v425
  %v442 = vmax.f32 %v410, %v426
  %v443 = vmax.f32 %v411, %v427
  %v444 = vmax.f32 %v412, %v428
  %v445 = vmax.f32 %v413, %v429
  %v446 = vmax.f32 %v414, %v430
  %v447 = vmax.f32 %v415, %v431
  %v448 = vmax.f32 %v416, %v432
  %v457 = vrot.slane %v442, 7
  %vm458 = vcmask 1041409
  %v459 = vsel %vm458, %v457, %v441
  %v460 = vrot.slane %v443, 6
  %vm461 = vcmask 1042434
  %v462 = vsel %vm461, %v460, %v459
  %v463 = vrot.slane %v444, 5
  %vm464 = vcmask 1043459
  %v465 = vsel %vm464, %v463, %v462
  %v466 = vrot.slane %v445, 4
  %vm467 = vcmask 1044484
  %v468 = vsel %vm467, %v466, %v465
  %v469 = vrot.slane %v446, 3
  %vm470 = vcmask 1045509
  %v471 = vsel %vm470, %v469, %v468
  %v472 = vrot.slane %v447, 2
  %vm473 = vcmask 1046534
  %v474 = vsel %vm473, %v472, %v471
  %v475 = vrot.slane %v448, 1
  %vm476 = vcmask 1047559
  %v477 = vsel %vm476, %v475, %v474
  %v479 = vrot.slane %v441, 2
  %v480 = vrot.slane %v442, 1
  %v481 = vsel %vm458, %v480, %v479
  %v482 = vsel %vm461, %v443, %v481
  %v483 = vrot.slane %v444, 7
  %v484 = vsel %vm464, %v483, %v482
  %v485 = vrot.slane %v445, 6
  %v486 = vsel %vm467, %v485, %v484
  %v487 = vrot.slane %v446, 5
  %v488 = vsel %vm470, %v487, %v486
  %v489 = vrot.slane %v447, 4
  %v490 = vsel %vm473, %v489, %v488
  %v491 = vrot.slane %v448, 3
  %v492 = vsel %vm476, %v491, %v490
  %493 = vrot.lane.b32.xlu0 %v492, 8
  %v494 = vpop.permute.xlu0 %493
  %v496 = vrot.slane %v441, 4
  %v497 = vrot.slane %v442, 3
  %v498 = vsel %vm458, %v497, %v496
  %v499 = vrot.slane %v443, 2
  %v500 = vsel %vm461, %v499, %v498
  %v501 = vrot.slane %v444, 1
  %v502 = vsel %vm464, %v501, %v500
  %v503 = vsel %vm467, %v445, %v502
  %v504 = vrot.slane %v446, 7
  %v505 = vsel %vm470, %v504, %v503
  %v506 = vrot.slane %v447, 6
  %v507 = vsel %vm473, %v506, %v505
  %v508 = vrot.slane %v448, 5
  %v509 = vsel %vm476, %v508, %v507
  %510 = vrot.lane.b32.xlu0 %v509, 16
  %v511 = vpop.permute.xlu0 %510
  %v513 = vrot.slane %v441, 6
  %v514 = vrot.slane %v442, 5
  %v515 = vsel %vm458, %v514, %v513
  %v516 = vrot.slane %v443, 4
  %v517 = vsel %vm461, %v516, %v515
  %v518 = vrot.slane %v444, 3
  %v519 = vsel %vm464, %v518, %v517
  %v520 = vrot.slane %v445, 2
  %v521 = vsel %vm467, %v520, %v519
  %v522 = vrot.slane %v446, 1
  %v523 = vsel %vm470, %v522, %v521
  %v524 = vsel %vm473, %v447, %v523
  %v525 = vrot.slane %v448, 7
  %v526 = vsel %vm476, %v525, %v524
  %527 = vrot.lane.b32.xlu0 %v526, 24
  %v528 = vpop.permute.xlu0 %527
  %v530 = vsel %vm177, %v477, %v494
  %vm531 = vcmask 130048
  %v532 = vsel %vm531, %v530, %v511
  %vm533 = vcmask 195584
  %v534 = vsel %vm533, %v532, %v528
  %v535 = vld [vmem:[%s4] sm:$0xff]
  %v536 = vld [vmem:[%s4 + $0x8] sm:$0xff]
  %v537 = vld [vmem:[%s4 + $0x10] sm:$0xff]
  %v538 = vld [vmem:[%s4 + $0x18] sm:$0xff]
  %v539 = vld [vmem:[%s5] sm:$0x1]
  %v541 = vlaneseq
  %v542 = vshrl.u32 %v541, 7
  %v543 = vsub.s32 0, %v542
  %v544 = vrot.slane %v539, %v543
  %vm546 = vcmask 261120
  %v548 = vsel %vm546, %v534, 0
  %550 = vmatprep.subr.mxu0 0.0
  %551 = vmatpush1.msra.mxu0 0.0
  %552 = vmatprep.subr.mxu0 0.0
  %553 = vmatpush1.msra.mxu0 0.0
  %554 = vmatprep.subr.mxu0 0.0
  %555 = vmatpush1.msra.mxu0 0.0
  %556 = vmatprep.subr.mxu0 0.0
  %557 = vmatpush1.msra.mxu0 0.0
  %558 = vmatprep.subr.mxu0 0.0
  %559 = vmatpush1.msra.mxu0 0.0
  %560 = vmatprep.subr.mxu0 0.0
  %561 = vmatpush1.msra.mxu0 0.0
  %562 = vmatprep.subr.mxu0 0.0
  %563 = vmatpush1.msra.mxu0 0.0
  %564 = vmatprep.subr.mxu0 0.0
  %565 = vmatpush1.msra.mxu0 0.0
  %566 = vmatprep.subr.mxu0 0.0
  %567 = vmatpush1.msra.mxu0 0.0
  %568 = vmatprep.subr.mxu0 0.0
  %569 = vmatpush1.msra.mxu0 0.0
  %570 = vmatprep.subr.mxu0 0.0
  %571 = vmatpush1.msra.mxu0 0.0
  %572 = vmatprep.subr.mxu0 0.0
  %573 = vmatpush1.msra.mxu0 0.0
  %574 = vmatprep.subr.mxu0 0.0
  %575 = vmatpush1.msra.mxu0 %v538
  %576 = vmatprep.subr.mxu0 0.0
  %577 = vmatpush1.msra.mxu0 %v537
  %578 = vmatprep.subr.mxu0 0.0
  %579 = vmatpush1.msra.mxu0 %v536
  %580 = vmatprep.subr.mxu0 0.0
  %581 = vmatpush1.msra.mxu0 %v535
  %582 = vmatprep.subr.mxu0 0.0
  %583 = vmatpush2.msra.mxu0 0.0
  %584 = vmatprep.subr.mxu0 0.0
  %585 = vmatpush2.msra.mxu0 0.0
  %586 = vmatprep.subr.mxu0 0.0
  %587 = vmatpush2.msra.mxu0 0.0
  %588 = vmatprep.subr.mxu0 0.0
  %589 = vmatpush2.msra.mxu0 0.0
  %590 = vmatprep.subr.mxu0 0.0
  %591 = vmatpush2.msra.mxu0 0.0
  %592 = vmatprep.subr.mxu0 0.0
  %593 = vmatpush2.msra.mxu0 0.0
  %594 = vmatprep.subr.mxu0 0.0
  %595 = vmatpush2.msra.mxu0 0.0
  %596 = vmatprep.subr.mxu0 0.0
  %597 = vmatpush2.msra.mxu0 0.0
  %598 = vmatprep.subr.mxu0 0.0
  %599 = vmatpush2.msra.mxu0 0.0
  %600 = vmatprep.subr.mxu0 0.0
  %601 = vmatpush2.msra.mxu0 0.0
  %602 = vmatprep.subr.mxu0 0.0
  %603 = vmatpush2.msra.mxu0 0.0
  %604 = vmatprep.subr.mxu0 0.0
  %605 = vmatpush2.msra.mxu0 0.0
  %606 = vmatprep.subr.mxu0 0.0
  %607 = vmatpush2.msra.mxu0 0.0
  %608 = vmatprep.subr.mxu0 0.0
  %609 = vmatpush2.msra.mxu0 0.0
  %610 = vmatprep.subr.mxu0 0.0
  %611 = vmatpush2.msra.mxu0 0.0
  %612 = vmatprep.subr.mxu0 0.0
  %613 = vmatpush2.msra.mxu0 0.0
  %614 = vmatprep.mubr.f32.mxu0 0.0
  %615 = vmatmul.mubr.f32.gmra.mxu0 %v548
  %v616 = vpop.f32.mrf.mxu0
  %v617 = vadd.f32 %v544, %v616
  %v618 = vpop.f32.mrf.mxu0
  %619 = vdwg.mxu0
  %v620 = vmax.f32 %v617, 0.0
  %v621 = vld [vmem:[%s7] sm:$0xff]
  %v622 = vld [vmem:[%s7 + $0x8] sm:$0xff]
  %v623 = vld [vmem:[%s7 + $0x10] sm:$0xff]
  %v624 = vld [vmem:[%s7 + $0x18] sm:$0xff]
  %v625 = vld [vmem:[%s0] sm:$0xff]
  %v626 = vld [vmem:[%s0 + $0x8] sm:$0xff]
  %v627 = vld [vmem:[%s0 + $0x10] sm:$0xff]
  %v628 = vld [vmem:[%s0 + $0x18] sm:$0xff]
  %v629 = vld [vmem:[%s0 + $0x20] sm:$0xff]
  %v630 = vld [vmem:[%s0 + $0x28] sm:$0xff]
  %v631 = vld [vmem:[%s0 + $0x30] sm:$0xff]
  %v632 = vld [vmem:[%s0 + $0x38] sm:$0xff]
  %v633 = vld [vmem:[%s6] sm:$0xff]
  %v634 = vld [vmem:[%s6 + $0x8] sm:$0xff]
  %v635 = vld [vmem:[%s6 + $0x10] sm:$0xff]
  %v636 = vld [vmem:[%s6 + $0x18] sm:$0xff]
  %v637 = vld [vmem:[%s6 + $0x20] sm:$0xff]
  %v638 = vld [vmem:[%s6 + $0x28] sm:$0xff]
  %v639 = vld [vmem:[%s6 + $0x30] sm:$0xff]
  %v640 = vld [vmem:[%s6 + $0x38] sm:$0xff]
  %v641 = vld [vmem:[%s9] sm:$0x3]
  %v643 = vlaneseq
  %v644 = vshrl.u32 %v643, 7
  %v645 = vsub.s32 0, %v644
  %v646 = vrot.slane %v641, %v645
  %v647 = vlaneseq
  %v648 = vshrl.u32 %v647, 7
  %v649 = vsub.s32 1, %v648
  %v650 = vrot.slane %v641, %v649
  %v654 = vsel %vm546, %v625, 0
  %v657 = vsel %vm546, %v626, 0
  %v660 = vsel %vm546, %v627, 0
  %v663 = vsel %vm546, %v628, 0
  %v666 = vsel %vm546, %v629, 0
  %v669 = vsel %vm546, %v630, 0
  %v672 = vsel %vm546, %v631, 0
  %v675 = vsel %vm546, %v632, 0
  %677 = vmatprep.subr.mxu0 0.0
  %678 = vmatpush1.msra.mxu0 0.0
  %679 = vmatprep.subr.mxu0 0.0
  %680 = vmatpush1.msra.mxu0 0.0
  %681 = vmatprep.subr.mxu0 0.0
  %682 = vmatpush1.msra.mxu0 0.0
  %683 = vmatprep.subr.mxu0 0.0
  %684 = vmatpush1.msra.mxu0 0.0
  %685 = vmatprep.subr.mxu0 0.0
  %686 = vmatpush1.msra.mxu0 0.0
  %687 = vmatprep.subr.mxu0 0.0
  %688 = vmatpush1.msra.mxu0 0.0
  %689 = vmatprep.subr.mxu0 0.0
  %690 = vmatpush1.msra.mxu0 0.0
  %691 = vmatprep.subr.mxu0 0.0
  %692 = vmatpush1.msra.mxu0 0.0
  %693 = vmatprep.subr.mxu0 0.0
  %694 = vmatpush1.msra.mxu0 0.0
  %695 = vmatprep.subr.mxu0 0.0
  %696 = vmatpush1.msra.mxu0 0.0
  %697 = vmatprep.subr.mxu0 0.0
  %698 = vmatpush1.msra.mxu0 0.0
  %699 = vmatprep.subr.mxu0 0.0
  %700 = vmatpush1.msra.mxu0 0.0
  %701 = vmatprep.subr.mxu0 %v640
  %702 = vmatpush1.msra.mxu0 %v639
  %703 = vmatprep.subr.mxu0 %v638
  %704 = vmatpush1.msra.mxu0 %v637
  %705 = vmatprep.subr.mxu0 %v636
  %706 = vmatpush1.msra.mxu0 %v635
  %707 = vmatprep.subr.mxu0 %v634
  %708 = vmatpush1.msra.mxu0 %v633
  %709 = vmatprep.subr.mxu0 0.0
  %710 = vmatpush2.msra.mxu0 0.0
  %711 = vmatprep.subr.mxu0 0.0
  %712 = vmatpush2.msra.mxu0 0.0
  %713 = vmatprep.subr.mxu0 0.0
  %714 = vmatpush2.msra.mxu0 0.0
  %715 = vmatprep.subr.mxu0 0.0
  %716 = vmatpush2.msra.mxu0 0.0
  %717 = vmatprep.subr.mxu0 0.0
  %718 = vmatpush2.msra.mxu0 0.0
  %719 = vmatprep.subr.mxu0 0.0
  %720 = vmatpush2.msra.mxu0 0.0
  %721 = vmatprep.subr.mxu0 0.0
  %722 = vmatpush2.msra.mxu0 0.0
  %723 = vmatprep.subr.mxu0 0.0
  %724 = vmatpush2.msra.mxu0 0.0
  %725 = vmatprep.subr.mxu0 0.0
  %726 = vmatpush2.msra.mxu0 0.0
  %727 = vmatprep.subr.mxu0 0.0
  %728 = vmatpush2.msra.mxu0 0.0
  %729 = vmatprep.subr.mxu0 0.0
  %730 = vmatpush2.msra.mxu0 0.0
  %731 = vmatprep.subr.mxu0 0.0
  %732 = vmatpush2.msra.mxu0 0.0
  %733 = vmatprep.subr.mxu0 0.0
  %734 = vmatpush2.msra.mxu0 0.0
  %735 = vmatprep.subr.mxu0 0.0
  %736 = vmatpush2.msra.mxu0 0.0
  %737 = vmatprep.subr.mxu0 0.0
  %738 = vmatpush2.msra.mxu0 0.0
  %739 = vmatprep.subr.mxu0 0.0
  %740 = vmatpush2.msra.mxu0 0.0
  %741 = vmatprep.mubr.f32.mxu0 0.0
  %742 = vmatmul.mubr.f32.gmra.mxu0 %v654
  %v743 = vpop.f32.mrf.mxu0
  %v744 = vadd.f32 %v646, %v743
  %v745 = vpop.f32.mrf.mxu0
  %v746 = vadd.f32 %v650, %v745
  %747 = vmatprep.mubr.f32.mxu0 0.0
  %748 = vmatmul.mubr.f32.gmra.mxu0 %v657
  %v749 = vpop.f32.mrf.mxu0
  %v750 = vadd.f32 %v646, %v749
  %v751 = vpop.f32.mrf.mxu0
  %v752 = vadd.f32 %v650, %v751
  %753 = vmatprep.mubr.f32.mxu0 0.0
  %754 = vmatmul.mubr.f32.gmra.mxu0 %v660
  %v755 = vpop.f32.mrf.mxu0
  %v756 = vadd.f32 %v646, %v755
  %v757 = vpop.f32.mrf.mxu0
  %v758 = vadd.f32 %v650, %v757
  %759 = vmatprep.mubr.f32.mxu0 0.0
  %760 = vmatmul.mubr.f32.gmra.mxu0 %v663
  %v761 = vpop.f32.mrf.mxu0
  %v762 = vadd.f32 %v646, %v761
  %v763 = vpop.f32.mrf.mxu0
  %v764 = vadd.f32 %v650, %v763
  %765 = vmatprep.mubr.f32.mxu0 0.0
  %766 = vmatmul.mubr.f32.gmra.mxu0 %v666
  %v767 = vpop.f32.mrf.mxu0
  %v768 = vadd.f32 %v646, %v767
  %v769 = vpop.f32.mrf.mxu0
  %v770 = vadd.f32 %v650, %v769
  %771 = vmatprep.mubr.f32.mxu0 0.0
  %772 = vmatmul.mubr.f32.gmra.mxu0 %v669
  %v773 = vpop.f32.mrf.mxu0
  %v774 = vadd.f32 %v646, %v773
  %v775 = vpop.f32.mrf.mxu0
  %v776 = vadd.f32 %v650, %v775
  %777 = vmatprep.mubr.f32.mxu0 0.0
  %778 = vmatmul.mubr.f32.gmra.mxu0 %v672
  %v779 = vpop.f32.mrf.mxu0
  %v780 = vadd.f32 %v646, %v779
  %v781 = vpop.f32.mrf.mxu0
  %v782 = vadd.f32 %v650, %v781
  %783 = vmatprep.mubr.f32.mxu0 0.0
  %784 = vmatmul.mubr.f32.gmra.mxu0 %v675
  %v785 = vpop.f32.mrf.mxu0
  %v786 = vadd.f32 %v646, %v785
  %v787 = vpop.f32.mrf.mxu0
  %v788 = vadd.f32 %v650, %v787
  %789 = vdwg.mxu0
  %v791 = vsel %vm531, %v620, 0
  %793 = vmatprep.subr.mxu0 0.0
  %794 = vmatpush1.msra.mxu0 0.0
  %795 = vmatprep.subr.mxu0 0.0
  %796 = vmatpush1.msra.mxu0 0.0
  %797 = vmatprep.subr.mxu0 0.0
  %798 = vmatpush1.msra.mxu0 0.0
  %799 = vmatprep.subr.mxu0 0.0
  %800 = vmatpush1.msra.mxu0 0.0
  %801 = vmatprep.subr.mxu0 0.0
  %802 = vmatpush1.msra.mxu0 0.0
  %803 = vmatprep.subr.mxu0 0.0
  %804 = vmatpush1.msra.mxu0 0.0
  %805 = vmatprep.subr.mxu0 0.0
  %806 = vmatpush1.msra.mxu0 0.0
  %807 = vmatprep.subr.mxu0 0.0
  %808 = vmatpush1.msra.mxu0 0.0
  %809 = vmatprep.subr.mxu0 0.0
  %810 = vmatpush1.msra.mxu0 0.0
  %811 = vmatprep.subr.mxu0 0.0
  %812 = vmatpush1.msra.mxu0 0.0
  %813 = vmatprep.subr.mxu0 0.0
  %814 = vmatpush1.msra.mxu0 0.0
  %815 = vmatprep.subr.mxu0 0.0
  %816 = vmatpush1.msra.mxu0 0.0
  %817 = vmatprep.subr.mxu0 0.0
  %818 = vmatpush1.msra.mxu0 0.0
  %819 = vmatprep.subr.mxu0 0.0
  %820 = vmatpush1.msra.mxu0 0.0
  %821 = vmatprep.subr.mxu0 %v624
  %822 = vmatpush1.msra.mxu0 %v623
  %823 = vmatprep.subr.mxu0 %v622
  %824 = vmatpush1.msra.mxu0 %v621
  %825 = vmatprep.subr.mxu0 0.0
  %826 = vmatpush2.msra.mxu0 0.0
  %827 = vmatprep.subr.mxu0 0.0
  %828 = vmatpush2.msra.mxu0 0.0
  %829 = vmatprep.subr.mxu0 0.0
  %830 = vmatpush2.msra.mxu0 0.0
  %831 = vmatprep.subr.mxu0 0.0
  %832 = vmatpush2.msra.mxu0 0.0
  %833 = vmatprep.subr.mxu0 0.0
  %834 = vmatpush2.msra.mxu0 0.0
  %835 = vmatprep.subr.mxu0 0.0
  %836 = vmatpush2.msra.mxu0 0.0
  %837 = vmatprep.subr.mxu0 0.0
  %838 = vmatpush2.msra.mxu0 0.0
  %839 = vmatprep.subr.mxu0 0.0
  %840 = vmatpush2.msra.mxu0 0.0
  %841 = vmatprep.subr.mxu0 0.0
  %842 = vmatpush2.msra.mxu0 0.0
  %843 = vmatprep.subr.mxu0 0.0
  %844 = vmatpush2.msra.mxu0 0.0
  %845 = vmatprep.subr.mxu0 0.0
  %846 = vmatpush2.msra.mxu0 0.0
  %847 = vmatprep.subr.mxu0 0.0
  %848 = vmatpush2.msra.mxu0 0.0
  %849 = vmatprep.subr.mxu0 0.0
  %850 = vmatpush2.msra.mxu0 0.0
  %851 = vmatprep.subr.mxu0 0.0
  %852 = vmatpush2.msra.mxu0 0.0
  %853 = vmatprep.subr.mxu0 0.0
  %854 = vmatpush2.msra.mxu0 0.0
  %855 = vmatprep.subr.mxu0 0.0
  %856 = vmatpush2.msra.mxu0 0.0
  %857 = vmatprep.mubr.f32.mxu0 0.0
  %858 = vmatmul.mubr.f32.gmra.mxu0 %v791
  %v859 = vpop.f32.mrf.mxu0
  %v860 = vadd.f32 0.0, %v859
  %v861 = vpop.f32.mrf.mxu0
  %v862 = vadd.f32 0.0, %v861
  %863 = vdwg.mxu0
  %v864 = vadd.f32 %v744, %v860
  %v865 = vadd.f32 %v746, %v862
  %866 = vrot.lane.b32.xlu0 %v620, 112
  %v867 = vpop.permute.xlu0 %866
  %v868 = vsel %vm531, %v867, 0
  %870 = vmatprep.subr.mxu0 0.0
  %871 = vmatpush1.msra.mxu0 0.0
  %872 = vmatprep.subr.mxu0 0.0
  %873 = vmatpush1.msra.mxu0 0.0
  %874 = vmatprep.subr.mxu0 0.0
  %875 = vmatpush1.msra.mxu0 0.0
  %876 = vmatprep.subr.mxu0 0.0
  %877 = vmatpush1.msra.mxu0 0.0
  %878 = vmatprep.subr.mxu0 0.0
  %879 = vmatpush1.msra.mxu0 0.0
  %880 = vmatprep.subr.mxu0 0.0
  %881 = vmatpush1.msra.mxu0 0.0
  %882 = vmatprep.subr.mxu0 0.0
  %883 = vmatpush1.msra.mxu0 0.0
  %884 = vmatprep.subr.mxu0 0.0
  %885 = vmatpush1.msra.mxu0 0.0
  %886 = vmatprep.subr.mxu0 0.0
  %887 = vmatpush1.msra.mxu0 0.0
  %888 = vmatprep.subr.mxu0 0.0
  %889 = vmatpush1.msra.mxu0 0.0
  %890 = vmatprep.subr.mxu0 0.0
  %891 = vmatpush1.msra.mxu0 0.0
  %892 = vmatprep.subr.mxu0 0.0
  %893 = vmatpush1.msra.mxu0 0.0
  %894 = vmatprep.subr.mxu0 0.0
  %895 = vmatpush1.msra.mxu0 0.0
  %896 = vmatprep.subr.mxu0 0.0
  %897 = vmatpush1.msra.mxu0 0.0
  %898 = vmatprep.subr.mxu0 %v624
  %899 = vmatpush1.msra.mxu0 %v623
  %900 = vmatprep.subr.mxu0 %v622
  %901 = vmatpush1.msra.mxu0 %v621
  %902 = vmatprep.subr.mxu0 0.0
  %903 = vmatpush2.msra.mxu0 0.0
  %904 = vmatprep.subr.mxu0 0.0
  %905 = vmatpush2.msra.mxu0 0.0
  %906 = vmatprep.subr.mxu0 0.0
  %907 = vmatpush2.msra.mxu0 0.0
  %908 = vmatprep.subr.mxu0 0.0
  %909 = vmatpush2.msra.mxu0 0.0
  %910 = vmatprep.subr.mxu0 0.0
  %911 = vmatpush2.msra.mxu0 0.0
  %912 = vmatprep.subr.mxu0 0.0
  %913 = vmatpush2.msra.mxu0 0.0
  %914 = vmatprep.subr.mxu0 0.0
  %915 = vmatpush2.msra.mxu0 0.0
  %916 = vmatprep.subr.mxu0 0.0
  %917 = vmatpush2.msra.mxu0 0.0
  %918 = vmatprep.subr.mxu0 0.0
  %919 = vmatpush2.msra.mxu0 0.0
  %920 = vmatprep.subr.mxu0 0.0
  %921 = vmatpush2.msra.mxu0 0.0
  %922 = vmatprep.subr.mxu0 0.0
  %923 = vmatpush2.msra.mxu0 0.0
  %924 = vmatprep.subr.mxu0 0.0
  %925 = vmatpush2.msra.mxu0 0.0
  %926 = vmatprep.subr.mxu0 0.0
  %927 = vmatpush2.msra.mxu0 0.0
  %928 = vmatprep.subr.mxu0 0.0
  %929 = vmatpush2.msra.mxu0 0.0
  %930 = vmatprep.subr.mxu0 0.0
  %931 = vmatpush2.msra.mxu0 0.0
  %932 = vmatprep.subr.mxu0 0.0
  %933 = vmatpush2.msra.mxu0 0.0
  %934 = vmatprep.mubr.f32.mxu0 0.0
  %935 = vmatmul.mubr.f32.gmra.mxu0 %v868
  %v936 = vpop.f32.mrf.mxu0
  %v937 = vadd.f32 0.0, %v936
  %v938 = vpop.f32.mrf.mxu0
  %v939 = vadd.f32 0.0, %v938
  %940 = vdwg.mxu0
  %v941 = vadd.f32 %v750, %v937
  %v942 = vadd.f32 %v752, %v939
  %943 = vrot.lane.b32.xlu0 %v620, 96
  %v944 = vpop.permute.xlu0 %943
  %v945 = vsel %vm531, %v944, 0
  %947 = vmatprep.subr.mxu0 0.0
  %948 = vmatpush1.msra.mxu0 0.0
  %949 = vmatprep.subr.mxu0 0.0
  %950 = vmatpush1.msra.mxu0 0.0
  %951 = vmatprep.subr.mxu0 0.0
  %952 = vmatpush1.msra.mxu0 0.0
  %953 = vmatprep.subr.mxu0 0.0
  %954 = vmatpush1.msra.mxu0 0.0
  %955 = vmatprep.subr.mxu0 0.0
  %956 = vmatpush1.msra.mxu0 0.0
  %957 = vmatprep.subr.mxu0 0.0
  %958 = vmatpush1.msra.mxu0 0.0
  %959 = vmatprep.subr.mxu0 0.0
  %960 = vmatpush1.msra.mxu0 0.0
  %961 = vmatprep.subr.mxu0 0.0
  %962 = vmatpush1.msra.mxu0 0.0
  %963 = vmatprep.subr.mxu0 0.0
  %964 = vmatpush1.msra.mxu0 0.0
  %965 = vmatprep.subr.mxu0 0.0
  %966 = vmatpush1.msra.mxu0 0.0
  %967 = vmatprep.subr.mxu0 0.0
  %968 = vmatpush1.msra.mxu0 0.0
  %969 = vmatprep.subr.mxu0 0.0
  %970 = vmatpush1.msra.mxu0 0.0
  %971 = vmatprep.subr.mxu0 0.0
  %972 = vmatpush1.msra.mxu0 0.0
  %973 = vmatprep.subr.mxu0 0.0
  %974 = vmatpush1.msra.mxu0 0.0
  %975 = vmatprep.subr.mxu0 %v624
  %976 = vmatpush1.msra.mxu0 %v623
  %977 = vmatprep.subr.mxu0 %v622
  %978 = vmatpush1.msra.mxu0 %v621
  %979 = vmatprep.subr.mxu0 0.0
  %980 = vmatpush2.msra.mxu0 0.0
  %981 = vmatprep.subr.mxu0 0.0
  %982 = vmatpush2.msra.mxu0 0.0
  %983 = vmatprep.subr.mxu0 0.0
  %984 = vmatpush2.msra.mxu0 0.0
  %985 = vmatprep.subr.mxu0 0.0
  %986 = vmatpush2.msra.mxu0 0.0
  %987 = vmatprep.subr.mxu0 0.0
  %988 = vmatpush2.msra.mxu0 0.0
  %989 = vmatprep.subr.mxu0 0.0
  %990 = vmatpush2.msra.mxu0 0.0
  %991 = vmatprep.subr.mxu0 0.0
  %992 = vmatpush2.msra.mxu0 0.0
  %993 = vmatprep.subr.mxu0 0.0
  %994 = vmatpush2.msra.mxu0 0.0
  %995 = vmatprep.subr.mxu0 0.0
  %996 = vmatpush2.msra.mxu0 0.0
  %997 = vmatprep.subr.mxu0 0.0
  %998 = vmatpush2.msra.mxu0 0.0
  %999 = vmatprep.subr.mxu0 0.0
  %1000 = vmatpush2.msra.mxu0 0.0
  %1001 = vmatprep.subr.mxu0 0.0
  %1002 = vmatpush2.msra.mxu0 0.0
  %1003 = vmatprep.subr.mxu0 0.0
  %1004 = vmatpush2.msra.mxu0 0.0
  %1005 = vmatprep.subr.mxu0 0.0
  %1006 = vmatpush2.msra.mxu0 0.0
  %1007 = vmatprep.subr.mxu0 0.0
  %1008 = vmatpush2.msra.mxu0 0.0
  %1009 = vmatprep.subr.mxu0 0.0
  %1010 = vmatpush2.msra.mxu0 0.0
  %1011 = vmatprep.mubr.f32.mxu0 0.0
  %1012 = vmatmul.mubr.f32.gmra.mxu0 %v945
  %v1013 = vpop.f32.mrf.mxu0
  %v1014 = vadd.f32 0.0, %v1013
  %v1015 = vpop.f32.mrf.mxu0
  %v1016 = vadd.f32 0.0, %v1015
  %1017 = vdwg.mxu0
  %v1018 = vadd.f32 %v756, %v1014
  %v1019 = vadd.f32 %v758, %v1016
  %1020 = vrot.lane.b32.xlu0 %v620, 80
  %v1021 = vpop.permute.xlu0 %1020
  %v1022 = vsel %vm531, %v1021, 0
  %1024 = vmatprep.subr.mxu0 0.0
  %1025 = vmatpush1.msra.mxu0 0.0
  %1026 = vmatprep.subr.mxu0 0.0
  %1027 = vmatpush1.msra.mxu0 0.0
  %1028 = vmatprep.subr.mxu0 0.0
  %1029 = vmatpush1.msra.mxu0 0.0
  %1030 = vmatprep.subr.mxu0 0.0
  %1031 = vmatpush1.msra.mxu0 0.0
  %1032 = vmatprep.subr.mxu0 0.0
  %1033 = vmatpush1.msra.mxu0 0.0
  %1034 = vmatprep.subr.mxu0 0.0
  %1035 = vmatpush1.msra.mxu0 0.0
  %1036 = vmatprep.subr.mxu0 0.0
  %1037 = vmatpush1.msra.mxu0 0.0
  %1038 = vmatprep.subr.mxu0 0.0
  %1039 = vmatpush1.msra.mxu0 0.0
  %1040 = vmatprep.subr.mxu0 0.0
  %1041 = vmatpush1.msra.mxu0 0.0
  %1042 = vmatprep.subr.mxu0 0.0
  %1043 = vmatpush1.msra.mxu0 0.0
  %1044 = vmatprep.subr.mxu0 0.0
  %1045 = vmatpush1.msra.mxu0 0.0
  %1046 = vmatprep.subr.mxu0 0.0
  %1047 = vmatpush1.msra.mxu0 0.0
  %1048 = vmatprep.subr.mxu0 0.0
  %1049 = vmatpush1.msra.mxu0 0.0
  %1050 = vmatprep.subr.mxu0 0.0
  %1051 = vmatpush1.msra.mxu0 0.0
  %1052 = vmatprep.subr.mxu0 %v624
  %1053 = vmatpush1.msra.mxu0 %v623
  %1054 = vmatprep.subr.mxu0 %v622
  %1055 = vmatpush1.msra.mxu0 %v621
  %1056 = vmatprep.subr.mxu0 0.0
  %1057 = vmatpush2.msra.mxu0 0.0
  %1058 = vmatprep.subr.mxu0 0.0
  %1059 = vmatpush2.msra.mxu0 0.0
  %1060 = vmatprep.subr.mxu0 0.0
  %1061 = vmatpush2.msra.mxu0 0.0
  %1062 = vmatprep.subr.mxu0 0.0
  %1063 = vmatpush2.msra.mxu0 0.0
  %1064 = vmatprep.subr.mxu0 0.0
  %1065 = vmatpush2.msra.mxu0 0.0
  %1066 = vmatprep.subr.mxu0 0.0
  %1067 = vmatpush2.msra.mxu0 0.0
  %1068 = vmatprep.subr.mxu0 0.0
  %1069 = vmatpush2.msra.mxu0 0.0
  %1070 = vmatprep.subr.mxu0 0.0
  %1071 = vmatpush2.msra.mxu0 0.0
  %1072 = vmatprep.subr.mxu0 0.0
  %1073 = vmatpush2.msra.mxu0 0.0
  %1074 = vmatprep.subr.mxu0 0.0
  %1075 = vmatpush2.msra.mxu0 0.0
  %1076 = vmatprep.subr.mxu0 0.0
  %1077 = vmatpush2.msra.mxu0 0.0
  %1078 = vmatprep.subr.mxu0 0.0
  %1079 = vmatpush2.msra.mxu0 0.0
  %1080 = vmatprep.subr.mxu0 0.0
  %1081 = vmatpush2.msra.mxu0 0.0
  %1082 = vmatprep.subr.mxu0 0.0
  %1083 = vmatpush2.msra.mxu0 0.0
  %1084 = vmatprep.subr.mxu0 0.0
  %1085 = vmatpush2.msra.mxu0 0.0
  %1086 = vmatprep.subr.mxu0 0.0
  %1087 = vmatpush2.msra.mxu0 0.0
  %1088 = vmatprep.mubr.f32.mxu0 0.0
  %1089 = vmatmul.mubr.f32.gmra.mxu0 %v1022
  %v1090 = vpop.f32.mrf.mxu0
  %v1091 = vadd.f32 0.0, %v1090
  %v1092 = vpop.f32.mrf.mxu0
  %v1093 = vadd.f32 0.0, %v1092
  %1094 = vdwg.mxu0
  %v1095 = vadd.f32 %v762, %v1091
  %v1096 = vadd.f32 %v764, %v1093
  %1097 = vrot.lane.b32.xlu0 %v620, 64
  %v1098 = vpop.permute.xlu0 %1097
  %v1099 = vsel %vm531, %v1098, 0
  %1101 = vmatprep.subr.mxu0 0.0
  %1102 = vmatpush1.msra.mxu0 0.0
  %1103 = vmatprep.subr.mxu0 0.0
  %1104 = vmatpush1.msra.mxu0 0.0
  %1105 = vmatprep.subr.mxu0 0.0
  %1106 = vmatpush1.msra.mxu0 0.0
  %1107 = vmatprep.subr.mxu0 0.0
  %1108 = vmatpush1.msra.mxu0 0.0
  %1109 = vmatprep.subr.mxu0 0.0
  %1110 = vmatpush1.msra.mxu0 0.0
  %1111 = vmatprep.subr.mxu0 0.0
  %1112 = vmatpush1.msra.mxu0 0.0
  %1113 = vmatprep.subr.mxu0 0.0
  %1114 = vmatpush1.msra.mxu0 0.0
  %1115 = vmatprep.subr.mxu0 0.0
  %1116 = vmatpush1.msra.mxu0 0.0
  %1117 = vmatprep.subr.mxu0 0.0
  %1118 = vmatpush1.msra.mxu0 0.0
  %1119 = vmatprep.subr.mxu0 0.0
  %1120 = vmatpush1.msra.mxu0 0.0
  %1121 = vmatprep.subr.mxu0 0.0
  %1122 = vmatpush1.msra.mxu0 0.0
  %1123 = vmatprep.subr.mxu0 0.0
  %1124 = vmatpush1.msra.mxu0 0.0
  %1125 = vmatprep.subr.mxu0 0.0
  %1126 = vmatpush1.msra.mxu0 0.0
  %1127 = vmatprep.subr.mxu0 0.0
  %1128 = vmatpush1.msra.mxu0 0.0
  %1129 = vmatprep.subr.mxu0 %v624
  %1130 = vmatpush1.msra.mxu0 %v623
  %1131 = vmatprep.subr.mxu0 %v622
  %1132 = vmatpush1.msra.mxu0 %v621
  %1133 = vmatprep.subr.mxu0 0.0
  %1134 = vmatpush2.msra.mxu0 0.0
  %1135 = vmatprep.subr.mxu0 0.0
  %1136 = vmatpush2.msra.mxu0 0.0
  %1137 = vmatprep.subr.mxu0 0.0
  %1138 = vmatpush2.msra.mxu0 0.0
  %1139 = vmatprep.subr.mxu0 0.0
  %1140 = vmatpush2.msra.mxu0 0.0
  %1141 = vmatprep.subr.mxu0 0.0
  %1142 = vmatpush2.msra.mxu0 0.0
  %1143 = vmatprep.subr.mxu0 0.0
  %1144 = vmatpush2.msra.mxu0 0.0
  %1145 = vmatprep.subr.mxu0 0.0
  %1146 = vmatpush2.msra.mxu0 0.0
  %1147 = vmatprep.subr.mxu0 0.0
  %1148 = vmatpush2.msra.mxu0 0.0
  %1149 = vmatprep.subr.mxu0 0.0
  %1150 = vmatpush2.msra.mxu0 0.0
  %1151 = vmatprep.subr.mxu0 0.0
  %1152 = vmatpush2.msra.mxu0 0.0
  %1153 = vmatprep.subr.mxu0 0.0
  %1154 = vmatpush2.msra.mxu0 0.0
  %1155 = vmatprep.subr.mxu0 0.0
  %1156 = vmatpush2.msra.mxu0 0.0
  %1157 = vmatprep.subr.mxu0 0.0
  %1158 = vmatpush2.msra.mxu0 0.0
  %1159 = vmatprep.subr.mxu0 0.0
  %1160 = vmatpush2.msra.mxu0 0.0
  %1161 = vmatprep.subr.mxu0 0.0
  %1162 = vmatpush2.msra.mxu0 0.0
  %1163 = vmatprep.subr.mxu0 0.0
  %1164 = vmatpush2.msra.mxu0 0.0
  %1165 = vmatprep.mubr.f32.mxu0 0.0
  %1166 = vmatmul.mubr.f32.gmra.mxu0 %v1099
  %v1167 = vpop.f32.mrf.mxu0
  %v1168 = vadd.f32 0.0, %v1167
  %v1169 = vpop.f32.mrf.mxu0
  %v1170 = vadd.f32 0.0, %v1169
  %1171 = vdwg.mxu0
  %v1172 = vadd.f32 %v768, %v1168
  %v1173 = vadd.f32 %v770, %v1170
  %1174 = vrot.lane.b32.xlu0 %v620, 48
  %v1175 = vpop.permute.xlu0 %1174
  %v1176 = vsel %vm531, %v1175, 0
  %1178 = vmatprep.subr.mxu0 0.0
  %1179 = vmatpush1.msra.mxu0 0.0
  %1180 = vmatprep.subr.mxu0 0.0
  %1181 = vmatpush1.msra.mxu0 0.0
  %1182 = vmatprep.subr.mxu0 0.0
  %1183 = vmatpush1.msra.mxu0 0.0
  %1184 = vmatprep.subr.mxu0 0.0
  %1185 = vmatpush1.msra.mxu0 0.0
  %1186 = vmatprep.subr.mxu0 0.0
  %1187 = vmatpush1.msra.mxu0 0.0
  %1188 = vmatprep.subr.mxu0 0.0
  %1189 = vmatpush1.msra.mxu0 0.0
  %1190 = vmatprep.subr.mxu0 0.0
  %1191 = vmatpush1.msra.mxu0 0.0
  %1192 = vmatprep.subr.mxu0 0.0
  %1193 = vmatpush1.msra.mxu0 0.0
  %1194 = vmatprep.subr.mxu0 0.0
  %1195 = vmatpush1.msra.mxu0 0.0
  %1196 = vmatprep.subr.mxu0 0.0
  %1197 = vmatpush1.msra.mxu0 0.0
  %1198 = vmatprep.subr.mxu0 0.0
  %1199 = vmatpush1.msra.mxu0 0.0
  %1200 = vmatprep.subr.mxu0 0.0
  %1201 = vmatpush1.msra.mxu0 0.0
  %1202 = vmatprep.subr.mxu0 0.0
  %1203 = vmatpush1.msra.mxu0 0.0
  %1204 = vmatprep.subr.mxu0 0.0
  %1205 = vmatpush1.msra.mxu0 0.0
  %1206 = vmatprep.subr.mxu0 %v624
  %1207 = vmatpush1.msra.mxu0 %v623
  %1208 = vmatprep.subr.mxu0 %v622
  %1209 = vmatpush1.msra.mxu0 %v621
  %1210 = vmatprep.subr.mxu0 0.0
  %1211 = vmatpush2.msra.mxu0 0.0
  %1212 = vmatprep.subr.mxu0 0.0
  %1213 = vmatpush2.msra.mxu0 0.0
  %1214 = vmatprep.subr.mxu0 0.0
  %1215 = vmatpush2.msra.mxu0 0.0
  %1216 = vmatprep.subr.mxu0 0.0
  %1217 = vmatpush2.msra.mxu0 0.0
  %1218 = vmatprep.subr.mxu0 0.0
  %1219 = vmatpush2.msra.mxu0 0.0
  %1220 = vmatprep.subr.mxu0 0.0
  %1221 = vmatpush2.msra.mxu0 0.0
  %1222 = vmatprep.subr.mxu0 0.0
  %1223 = vmatpush2.msra.mxu0 0.0
  %1224 = vmatprep.subr.mxu0 0.0
  %1225 = vmatpush2.msra.mxu0 0.0
  %1226 = vmatprep.subr.mxu0 0.0
  %1227 = vmatpush2.msra.mxu0 0.0
  %1228 = vmatprep.subr.mxu0 0.0
  %1229 = vmatpush2.msra.mxu0 0.0
  %1230 = vmatprep.subr.mxu0 0.0
  %1231 = vmatpush2.msra.mxu0 0.0
  %1232 = vmatprep.subr.mxu0 0.0
  %1233 = vmatpush2.msra.mxu0 0.0
  %1234 = vmatprep.subr.mxu0 0.0
  %1235 = vmatpush2.msra.mxu0 0.0
  %1236 = vmatprep.subr.mxu0 0.0
  %1237 = vmatpush2.msra.mxu0 0.0
  %1238 = vmatprep.subr.mxu0 0.0
  %1239 = vmatpush2.msra.mxu0 0.0
  %1240 = vmatprep.subr.mxu0 0.0
  %1241 = vmatpush2.msra.mxu0 0.0
  %1242 = vmatprep.mubr.f32.mxu0 0.0
  %1243 = vmatmul.mubr.f32.gmra.mxu0 %v1176
  %v1244 = vpop.f32.mrf.mxu0
  %v1245 = vadd.f32 0.0, %v1244
  %v1246 = vpop.f32.mrf.mxu0
  %v1247 = vadd.f32 0.0, %v1246
  %1248 = vdwg.mxu0
  %v1249 = vadd.f32 %v774, %v1245
  %v1250 = vadd.f32 %v776, %v1247
  %1251 = vrot.lane.b32.xlu0 %v620, 32
  %v1252 = vpop.permute.xlu0 %1251
  %v1253 = vsel %vm531, %v1252, 0
  %1255 = vmatprep.subr.mxu0 0.0
  %1256 = vmatpush1.msra.mxu0 0.0
  %1257 = vmatprep.subr.mxu0 0.0
  %1258 = vmatpush1.msra.mxu0 0.0
  %1259 = vmatprep.subr.mxu0 0.0
  %1260 = vmatpush1.msra.mxu0 0.0
  %1261 = vmatprep.subr.mxu0 0.0
  %1262 = vmatpush1.msra.mxu0 0.0
  %1263 = vmatprep.subr.mxu0 0.0
  %1264 = vmatpush1.msra.mxu0 0.0
  %1265 = vmatprep.subr.mxu0 0.0
  %1266 = vmatpush1.msra.mxu0 0.0
  %1267 = vmatprep.subr.mxu0 0.0
  %1268 = vmatpush1.msra.mxu0 0.0
  %1269 = vmatprep.subr.mxu0 0.0
  %1270 = vmatpush1.msra.mxu0 0.0
  %1271 = vmatprep.subr.mxu0 0.0
  %1272 = vmatpush1.msra.mxu0 0.0
  %1273 = vmatprep.subr.mxu0 0.0
  %1274 = vmatpush1.msra.mxu0 0.0
  %1275 = vmatprep.subr.mxu0 0.0
  %1276 = vmatpush1.msra.mxu0 0.0
  %1277 = vmatprep.subr.mxu0 0.0
  %1278 = vmatpush1.msra.mxu0 0.0
  %1279 = vmatprep.subr.mxu0 0.0
  %1280 = vmatpush1.msra.mxu0 0.0
  %1281 = vmatprep.subr.mxu0 0.0
  %1282 = vmatpush1.msra.mxu0 0.0
  %1283 = vmatprep.subr.mxu0 %v624
  %1284 = vmatpush1.msra.mxu0 %v623
  %1285 = vmatprep.subr.mxu0 %v622
  %1286 = vmatpush1.msra.mxu0 %v621
  %1287 = vmatprep.subr.mxu0 0.0
  %1288 = vmatpush2.msra.mxu0 0.0
  %1289 = vmatprep.subr.mxu0 0.0
  %1290 = vmatpush2.msra.mxu0 0.0
  %1291 = vmatprep.subr.mxu0 0.0
  %1292 = vmatpush2.msra.mxu0 0.0
  %1293 = vmatprep.subr.mxu0 0.0
  %1294 = vmatpush2.msra.mxu0 0.0
  %1295 = vmatprep.subr.mxu0 0.0
  %1296 = vmatpush2.msra.mxu0 0.0
  %1297 = vmatprep.subr.mxu0 0.0
  %1298 = vmatpush2.msra.mxu0 0.0
  %1299 = vmatprep.subr.mxu0 0.0
  %1300 = vmatpush2.msra.mxu0 0.0
  %1301 = vmatprep.subr.mxu0 0.0
  %1302 = vmatpush2.msra.mxu0 0.0
  %1303 = vmatprep.subr.mxu0 0.0
  %1304 = vmatpush2.msra.mxu0 0.0
  %1305 = vmatprep.subr.mxu0 0.0
  %1306 = vmatpush2.msra.mxu0 0.0
  %1307 = vmatprep.subr.mxu0 0.0
  %1308 = vmatpush2.msra.mxu0 0.0
  %1309 = vmatprep.subr.mxu0 0.0
  %1310 = vmatpush2.msra.mxu0 0.0
  %1311 = vmatprep.subr.mxu0 0.0
  %1312 = vmatpush2.msra.mxu0 0.0
  %1313 = vmatprep.subr.mxu0 0.0
  %1314 = vmatpush2.msra.mxu0 0.0
  %1315 = vmatprep.subr.mxu0 0.0
  %1316 = vmatpush2.msra.mxu0 0.0
  %1317 = vmatprep.subr.mxu0 0.0
  %1318 = vmatpush2.msra.mxu0 0.0
  %1319 = vmatprep.mubr.f32.mxu0 0.0
  %1320 = vmatmul.mubr.f32.gmra.mxu0 %v1253
  %v1321 = vpop.f32.mrf.mxu0
  %v1322 = vadd.f32 0.0, %v1321
  %v1323 = vpop.f32.mrf.mxu0
  %v1324 = vadd.f32 0.0, %v1323
  %1325 = vdwg.mxu0
  %v1326 = vadd.f32 %v780, %v1322
  %v1327 = vadd.f32 %v782, %v1324
  %1328 = vrot.lane.b32.xlu0 %v620, 16
  %v1329 = vpop.permute.xlu0 %1328
  %v1330 = vsel %vm531, %v1329, 0
  %1332 = vmatprep.subr.mxu0 0.0
  %1333 = vmatpush1.msra.mxu0 0.0
  %1334 = vmatprep.subr.mxu0 0.0
  %1335 = vmatpush1.msra.mxu0 0.0
  %1336 = vmatprep.subr.mxu0 0.0
  %1337 = vmatpush1.msra.mxu0 0.0
  %1338 = vmatprep.subr.mxu0 0.0
  %1339 = vmatpush1.msra.mxu0 0.0
  %1340 = vmatprep.subr.mxu0 0.0
  %1341 = vmatpush1.msra.mxu0 0.0
  %1342 = vmatprep.subr.mxu0 0.0
  %1343 = vmatpush1.msra.mxu0 0.0
  %1344 = vmatprep.subr.mxu0 0.0
  %1345 = vmatpush1.msra.mxu0 0.0
  %1346 = vmatprep.subr.mxu0 0.0
  %1347 = vmatpush1.msra.mxu0 0.0
  %1348 = vmatprep.subr.mxu0 0.0
  %1349 = vmatpush1.msra.mxu0 0.0
  %1350 = vmatprep.subr.mxu0 0.0
  %1351 = vmatpush1.msra.mxu0 0.0
  %1352 = vmatprep.subr.mxu0 0.0
  %1353 = vmatpush1.msra.mxu0 0.0
  %1354 = vmatprep.subr.mxu0 0.0
  %1355 = vmatpush1.msra.mxu0 0.0
  %1356 = vmatprep.subr.mxu0 0.0
  %1357 = vmatpush1.msra.mxu0 0.0
  %1358 = vmatprep.subr.mxu0 0.0
  %1359 = vmatpush1.msra.mxu0 0.0
  %1360 = vmatprep.subr.mxu0 %v624
  %1361 = vmatpush1.msra.mxu0 %v623
  %1362 = vmatprep.subr.mxu0 %v622
  %1363 = vmatpush1.msra.mxu0 %v621
  %1364 = vmatprep.subr.mxu0 0.0
  %1365 = vmatpush2.msra.mxu0 0.0
  %1366 = vmatprep.subr.mxu0 0.0
  %1367 = vmatpush2.msra.mxu0 0.0
  %1368 = vmatprep.subr.mxu0 0.0
  %1369 = vmatpush2.msra.mxu0 0.0
  %1370 = vmatprep.subr.mxu0 0.0
  %1371 = vmatpush2.msra.mxu0 0.0
  %1372 = vmatprep.subr.mxu0 0.0
  %1373 = vmatpush2.msra.mxu0 0.0
  %1374 = vmatprep.subr.mxu0 0.0
  %1375 = vmatpush2.msra.mxu0 0.0
  %1376 = vmatprep.subr.mxu0 0.0
  %1377 = vmatpush2.msra.mxu0 0.0
  %1378 = vmatprep.subr.mxu0 0.0
  %1379 = vmatpush2.msra.mxu0 0.0
  %1380 = vmatprep.subr.mxu0 0.0
  %1381 = vmatpush2.msra.mxu0 0.0
  %1382 = vmatprep.subr.mxu0 0.0
  %1383 = vmatpush2.msra.mxu0 0.0
  %1384 = vmatprep.subr.mxu0 0.0
  %1385 = vmatpush2.msra.mxu0 0.0
  %1386 = vmatprep.subr.mxu0 0.0
  %1387 = vmatpush2.msra.mxu0 0.0
  %1388 = vmatprep.subr.mxu0 0.0
  %1389 = vmatpush2.msra.mxu0 0.0
  %1390 = vmatprep.subr.mxu0 0.0
  %1391 = vmatpush2.msra.mxu0 0.0
  %1392 = vmatprep.subr.mxu0 0.0
  %1393 = vmatpush2.msra.mxu0 0.0
  %1394 = vmatprep.subr.mxu0 0.0
  %1395 = vmatpush2.msra.mxu0 0.0
  %1396 = vmatprep.mubr.f32.mxu0 0.0
  %1397 = vmatmul.mubr.f32.gmra.mxu0 %v1330
  %v1398 = vpop.f32.mrf.mxu0
  %v1399 = vadd.f32 0.0, %v1398
  %v1400 = vpop.f32.mrf.mxu0
  %v1401 = vadd.f32 0.0, %v1400
  %1402 = vdwg.mxu0
  %v1403 = vadd.f32 %v786, %v1399
  %v1404 = vadd.f32 %v788, %v1401
  %v1405 = vld [vmem:[%s8] sm:$0xff]
  %v1406 = vld [vmem:[%s8 + $0x8] sm:$0xff]
  %v1407 = vld [vmem:[%s8 + $0x10] sm:$0xff]
  %v1408 = vld [vmem:[%s8 + $0x18] sm:$0xff]
  %v1409 = vld [vmem:[%s8 + $0x20] sm:$0xff]
  %v1410 = vld [vmem:[%s8 + $0x28] sm:$0xff]
  %v1411 = vld [vmem:[%s8 + $0x30] sm:$0xff]
  %v1412 = vld [vmem:[%s8 + $0x38] sm:$0xff]
  %v1413 = vld [vmem:[%s8 + $0x40] sm:$0xff]
  %v1414 = vld [vmem:[%s8 + $0x48] sm:$0xff]
  %v1415 = vld [vmem:[%s8 + $0x50] sm:$0xff]
  %v1416 = vld [vmem:[%s8 + $0x58] sm:$0xff]
  %v1417 = vld [vmem:[%s8 + $0x60] sm:$0xff]
  %v1418 = vld [vmem:[%s8 + $0x68] sm:$0xff]
  %v1419 = vld [vmem:[%s8 + $0x70] sm:$0xff]
  %v1420 = vld [vmem:[%s8 + $0x78] sm:$0xff]
  %vm1421 = vcmask 523264
  %v1423 = vsel %vm1421, 0.0, 0
  %1425 = vmatprep.subr.mxu0 0.0
  %1426 = vmatpush1.msra.mxu0 0.0
  %1427 = vmatprep.subr.mxu0 0.0
  %1428 = vmatpush1.msra.mxu0 0.0
  %1429 = vmatprep.subr.mxu0 0.0
  %1430 = vmatpush1.msra.mxu0 0.0
  %1431 = vmatprep.subr.mxu0 0.0
  %1432 = vmatpush1.msra.mxu0 0.0
  %1433 = vmatprep.subr.mxu0 0.0
  %1434 = vmatpush1.msra.mxu0 0.0
  %1435 = vmatprep.subr.mxu0 0.0
  %1436 = vmatpush1.msra.mxu0 0.0
  %1437 = vmatprep.subr.mxu0 0.0
  %1438 = vmatpush1.msra.mxu0 0.0
  %1439 = vmatprep.subr.mxu0 0.0
  %1440 = vmatpush1.msra.mxu0 0.0
  %1441 = vmatprep.subr.mxu0 %v1420
  %1442 = vmatpush1.msra.mxu0 %v1419
  %1443 = vmatprep.subr.mxu0 %v1418
  %1444 = vmatpush1.msra.mxu0 %v1417
  %1445 = vmatprep.subr.mxu0 %v1416
  %1446 = vmatpush1.msra.mxu0 %v1415
  %1447 = vmatprep.subr.mxu0 %v1414
  %1448 = vmatpush1.msra.mxu0 %v1413
  %1449 = vmatprep.subr.mxu0 %v1412
  %1450 = vmatpush1.msra.mxu0 %v1411
  %1451 = vmatprep.subr.mxu0 %v1410
  %1452 = vmatpush1.msra.mxu0 %v1409
  %1453 = vmatprep.subr.mxu0 %v1408
  %1454 = vmatpush1.msra.mxu0 %v1407
  %1455 = vmatprep.subr.mxu0 %v1406
  %1456 = vmatpush1.msra.mxu0 %v1405
  %1457 = vmatprep.subr.mxu0 0.0
  %1458 = vmatpush2.msra.mxu0 0.0
  %1459 = vmatprep.subr.mxu0 0.0
  %1460 = vmatpush2.msra.mxu0 0.0
  %1461 = vmatprep.subr.mxu0 0.0
  %1462 = vmatpush2.msra.mxu0 0.0
  %1463 = vmatprep.subr.mxu0 0.0
  %1464 = vmatpush2.msra.mxu0 0.0
  %1465 = vmatprep.subr.mxu0 0.0
  %1466 = vmatpush2.msra.mxu0 0.0
  %1467 = vmatprep.subr.mxu0 0.0
  %1468 = vmatpush2.msra.mxu0 0.0
  %1469 = vmatprep.subr.mxu0 0.0
  %1470 = vmatpush2.msra.mxu0 0.0
  %1471 = vmatprep.subr.mxu0 0.0
  %1472 = vmatpush2.msra.mxu0 0.0
  %1473 = vmatprep.subr.mxu0 0.0
  %1474 = vmatpush2.msra.mxu0 0.0
  %1475 = vmatprep.subr.mxu0 0.0
  %1476 = vmatpush2.msra.mxu0 0.0
  %1477 = vmatprep.subr.mxu0 0.0
  %1478 = vmatpush2.msra.mxu0 0.0
  %1479 = vmatprep.subr.mxu0 0.0
  %1480 = vmatpush2.msra.mxu0 0.0
  %1481 = vmatprep.subr.mxu0 0.0
  %1482 = vmatpush2.msra.mxu0 0.0
  %1483 = vmatprep.subr.mxu0 0.0
  %1484 = vmatpush2.msra.mxu0 0.0
  %1485 = vmatprep.subr.mxu0 0.0
  %1486 = vmatpush2.msra.mxu0 0.0
  %1487 = vmatprep.subr.mxu0 0.0
  %1488 = vmatpush2.msra.mxu0 0.0
  %1489 = vmatprep.mubr.f32.mxu0 0.0
  %1490 = vmatmul.mubr.f32.gmra.mxu0 %v1423
  %v1491 = vpop.f32.mrf.mxu0
  %v1492 = vadd.f32 0.0, %v1491
  %v1493 = vpop.f32.mrf.mxu0
  %v1494 = vadd.f32 0.0, %v1493
  %1495 = vdwg.mxu0
  %v1496 = vadd.f32 %v864, %v1492
  %v1497 = vadd.f32 %v865, %v1494
  %v1498 = vxor.u32 %v1496, 2147483648
  %v1499 = vxor.u32 %v1497, 2147483648
  %v1500 = vmul.f32 %v1498, 1.442695
  %v1501 = vpow.pop %v1500
  %v1502 = vmul.f32 %v1499, 1.442695
  %v1503 = vpow.pop %v1502
  %v1504 = vadd.f32 %v1501, 1.0
  %v1505 = vadd.f32 %v1503, 1.0
  %v1506 = vrcp.pop %v1504
  %v1507 = vmul.f32 1.0, %v1506
  %v1508 = vrcp.pop %v1505
  %v1509 = vmul.f32 1.0, %v1508
  %v1510 = vtanh.pop %v1497
  %v1511 = vmul.f32 %v1507, 0.0
  %1513 = vrot.lane.b32.xlu0 %v1510, 64
  %v1514 = vpop.permute.xlu0 %1513
  %v1516 = vmul.f32 %v1507, %v1514
  %1518 = vrot.lane.b32.xlu0 %v1516, 64
  %v1519 = vpop.permute.xlu0 %1518
  %v1521 = vadd.f32 %v1511, %v1519
  %v1522 = vtanh.pop %v1521
  %1524 = vrot.lane.b32.xlu0 %v1522, 64
  %v1525 = vpop.permute.xlu0 %1524
  %v1527 = vmul.f32 %v1509, %v1525
  %v1528 = vadd.f32 %v1527, 0.0
  %v1530 = vsel %vm1421, %v1527, 0
  %1532 = vmatprep.subr.mxu0 0.0
  %1533 = vmatpush1.msra.mxu0 0.0
  %1534 = vmatprep.subr.mxu0 0.0
  %1535 = vmatpush1.msra.mxu0 0.0
  %1536 = vmatprep.subr.mxu0 0.0
  %1537 = vmatpush1.msra.mxu0 0.0
  %1538 = vmatprep.subr.mxu0 0.0
  %1539 = vmatpush1.msra.mxu0 0.0
  %1540 = vmatprep.subr.mxu0 0.0
  %1541 = vmatpush1.msra.mxu0 0.0
  %1542 = vmatprep.subr.mxu0 0.0
  %1543 = vmatpush1.msra.mxu0 0.0
  %1544 = vmatprep.subr.mxu0 0.0
  %1545 = vmatpush1.msra.mxu0 0.0
  %1546 = vmatprep.subr.mxu0 0.0
  %1547 = vmatpush1.msra.mxu0 0.0
  %1548 = vmatprep.subr.mxu0 %v1420
  %1549 = vmatpush1.msra.mxu0 %v1419
  %1550 = vmatprep.subr.mxu0 %v1418
  %1551 = vmatpush1.msra.mxu0 %v1417
  %1552 = vmatprep.subr.mxu0 %v1416
  %1553 = vmatpush1.msra.mxu0 %v1415
  %1554 = vmatprep.subr.mxu0 %v1414
  %1555 = vmatpush1.msra.mxu0 %v1413
  %1556 = vmatprep.subr.mxu0 %v1412
  %1557 = vmatpush1.msra.mxu0 %v1411
  %1558 = vmatprep.subr.mxu0 %v1410
  %1559 = vmatpush1.msra.mxu0 %v1409
  %1560 = vmatprep.subr.mxu0 %v1408
  %1561 = vmatpush1.msra.mxu0 %v1407
  %1562 = vmatprep.subr.mxu0 %v1406
  %1563 = vmatpush1.msra.mxu0 %v1405
  %1564 = vmatprep.subr.mxu0 0.0
  %1565 = vmatpush2.msra.mxu0 0.0
  %1566 = vmatprep.subr.mxu0 0.0
  %1567 = vmatpush2.msra.mxu0 0.0
  %1568 = vmatprep.subr.mxu0 0.0
  %1569 = vmatpush2.msra.mxu0 0.0
  %1570 = vmatprep.subr.mxu0 0.0
  %1571 = vmatpush2.msra.mxu0 0.0
  %1572 = vmatprep.subr.mxu0 0.0
  %1573 = vmatpush2.msra.mxu0 0.0
  %1574 = vmatprep.subr.mxu0 0.0
  %1575 = vmatpush2.msra.mxu0 0.0
  %1576 = vmatprep.subr.mxu0 0.0
  %1577 = vmatpush2.msra.mxu0 0.0
  %1578 = vmatprep.subr.mxu0 0.0
  %1579 = vmatpush2.msra.mxu0 0.0
  %1580 = vmatprep.subr.mxu0 0.0
  %1581 = vmatpush2.msra.mxu0 0.0
  %1582 = vmatprep.subr.mxu0 0.0
  %1583 = vmatpush2.msra.mxu0 0.0
  %1584 = vmatprep.subr.mxu0 0.0
  %1585 = vmatpush2.msra.mxu0 0.0
  %1586 = vmatprep.subr.mxu0 0.0
  %1587 = vmatpush2.msra.mxu0 0.0
  %1588 = vmatprep.subr.mxu0 0.0
  %1589 = vmatpush2.msra.mxu0 0.0
  %1590 = vmatprep.subr.mxu0 0.0
  %1591 = vmatpush2.msra.mxu0 0.0
  %1592 = vmatprep.subr.mxu0 0.0
  %1593 = vmatpush2.msra.mxu0 0.0
  %1594 = vmatprep.subr.mxu0 0.0
  %1595 = vmatpush2.msra.mxu0 0.0
  %1596 = vmatprep.mubr.f32.mxu0 0.0
  %1597 = vmatmul.mubr.f32.gmra.mxu0 %v1530
  %v1598 = vpop.f32.mrf.mxu0
  %v1599 = vadd.f32 0.0, %v1598
  %v1600 = vpop.f32.mrf.mxu0
  %v1601 = vadd.f32 0.0, %v1600
  %1602 = vdwg.mxu0
  %v1603 = vadd.f32 %v941, %v1599
  %v1604 = vadd.f32 %v942, %v1601
  %v1605 = vxor.u32 %v1603, 2147483648
  %v1606 = vxor.u32 %v1604, 2147483648
  %v1607 = vmul.f32 %v1605, 1.442695
  %v1608 = vpow.pop %v1607
  %v1609 = vmul.f32 %v1606, 1.442695
  %v1610 = vpow.pop %v1609
  %v1611 = vadd.f32 %v1608, 1.0
  %v1612 = vadd.f32 %v1610, 1.0
  %v1613 = vrcp.pop %v1611
  %v1614 = vmul.f32 1.0, %v1613
  %v1615 = vrcp.pop %v1612
  %v1616 = vmul.f32 1.0, %v1615
  %v1617 = vtanh.pop %v1604
  %v1618 = vmul.f32 %v1614, %v1521
  %1620 = vrot.lane.b32.xlu0 %v1617, 64
  %v1621 = vpop.permute.xlu0 %1620
  %v1623 = vmul.f32 %v1614, %v1621
  %1625 = vrot.lane.b32.xlu0 %v1623, 64
  %v1626 = vpop.permute.xlu0 %1625
  %v1628 = vadd.f32 %v1618, %v1626
  %v1629 = vtanh.pop %v1628
  %1631 = vrot.lane.b32.xlu0 %v1629, 64
  %v1632 = vpop.permute.xlu0 %1631
  %v1634 = vmul.f32 %v1616, %v1632
  %v1635 = vadd.f32 %v1528, %v1634
  %v1637 = vsel %vm1421, %v1634, 0
  %1639 = vmatprep.subr.mxu0 0.0
  %1640 = vmatpush1.msra.mxu0 0.0
  %1641 = vmatprep.subr.mxu0 0.0
  %1642 = vmatpush1.msra.mxu0 0.0
  %1643 = vmatprep.subr.mxu0 0.0
  %1644 = vmatpush1.msra.mxu0 0.0
  %1645 = vmatprep.subr.mxu0 0.0
  %1646 = vmatpush1.msra.mxu0 0.0
  %1647 = vmatprep.subr.mxu0 0.0
  %1648 = vmatpush1.msra.mxu0 0.0
  %1649 = vmatprep.subr.mxu0 0.0
  %1650 = vmatpush1.msra.mxu0 0.0
  %1651 = vmatprep.subr.mxu0 0.0
  %1652 = vmatpush1.msra.mxu0 0.0
  %1653 = vmatprep.subr.mxu0 0.0
  %1654 = vmatpush1.msra.mxu0 0.0
  %1655 = vmatprep.subr.mxu0 %v1420
  %1656 = vmatpush1.msra.mxu0 %v1419
  %1657 = vmatprep.subr.mxu0 %v1418
  %1658 = vmatpush1.msra.mxu0 %v1417
  %1659 = vmatprep.subr.mxu0 %v1416
  %1660 = vmatpush1.msra.mxu0 %v1415
  %1661 = vmatprep.subr.mxu0 %v1414
  %1662 = vmatpush1.msra.mxu0 %v1413
  %1663 = vmatprep.subr.mxu0 %v1412
  %1664 = vmatpush1.msra.mxu0 %v1411
  %1665 = vmatprep.subr.mxu0 %v1410
  %1666 = vmatpush1.msra.mxu0 %v1409
  %1667 = vmatprep.subr.mxu0 %v1408
  %1668 = vmatpush1.msra.mxu0 %v1407
  %1669 = vmatprep.subr.mxu0 %v1406
  %1670 = vmatpush1.msra.mxu0 %v1405
  %1671 = vmatprep.subr.mxu0 0.0
  %1672 = vmatpush2.msra.mxu0 0.0
  %1673 = vmatprep.subr.mxu0 0.0
  %1674 = vmatpush2.msra.mxu0 0.0
  %1675 = vmatprep.subr.mxu0 0.0
  %1676 = vmatpush2.msra.mxu0 0.0
  %1677 = vmatprep.subr.mxu0 0.0
  %1678 = vmatpush2.msra.mxu0 0.0
  %1679 = vmatprep.subr.mxu0 0.0
  %1680 = vmatpush2.msra.mxu0 0.0
  %1681 = vmatprep.subr.mxu0 0.0
  %1682 = vmatpush2.msra.mxu0 0.0
  %1683 = vmatprep.subr.mxu0 0.0
  %1684 = vmatpush2.msra.mxu0 0.0
  %1685 = vmatprep.subr.mxu0 0.0
  %1686 = vmatpush2.msra.mxu0 0.0
  %1687 = vmatprep.subr.mxu0 0.0
  %1688 = vmatpush2.msra.mxu0 0.0
  %1689 = vmatprep.subr.mxu0 0.0
  %1690 = vmatpush2.msra.mxu0 0.0
  %1691 = vmatprep.subr.mxu0 0.0
  %1692 = vmatpush2.msra.mxu0 0.0
  %1693 = vmatprep.subr.mxu0 0.0
  %1694 = vmatpush2.msra.mxu0 0.0
  %1695 = vmatprep.subr.mxu0 0.0
  %1696 = vmatpush2.msra.mxu0 0.0
  %1697 = vmatprep.subr.mxu0 0.0
  %1698 = vmatpush2.msra.mxu0 0.0
  %1699 = vmatprep.subr.mxu0 0.0
  %1700 = vmatpush2.msra.mxu0 0.0
  %1701 = vmatprep.subr.mxu0 0.0
  %1702 = vmatpush2.msra.mxu0 0.0
  %1703 = vmatprep.mubr.f32.mxu0 0.0
  %1704 = vmatmul.mubr.f32.gmra.mxu0 %v1637
  %v1705 = vpop.f32.mrf.mxu0
  %v1706 = vadd.f32 0.0, %v1705
  %v1707 = vpop.f32.mrf.mxu0
  %v1708 = vadd.f32 0.0, %v1707
  %1709 = vdwg.mxu0
  %v1710 = vadd.f32 %v1018, %v1706
  %v1711 = vadd.f32 %v1019, %v1708
  %v1712 = vxor.u32 %v1710, 2147483648
  %v1713 = vxor.u32 %v1711, 2147483648
  %v1714 = vmul.f32 %v1712, 1.442695
  %v1715 = vpow.pop %v1714
  %v1716 = vmul.f32 %v1713, 1.442695
  %v1717 = vpow.pop %v1716
  %v1718 = vadd.f32 %v1715, 1.0
  %v1719 = vadd.f32 %v1717, 1.0
  %v1720 = vrcp.pop %v1718
  %v1721 = vmul.f32 1.0, %v1720
  %v1722 = vrcp.pop %v1719
  %v1723 = vmul.f32 1.0, %v1722
  %v1724 = vtanh.pop %v1711
  %v1725 = vmul.f32 %v1721, %v1628
  %1727 = vrot.lane.b32.xlu0 %v1724, 64
  %v1728 = vpop.permute.xlu0 %1727
  %v1730 = vmul.f32 %v1721, %v1728
  %1732 = vrot.lane.b32.xlu0 %v1730, 64
  %v1733 = vpop.permute.xlu0 %1732
  %v1735 = vadd.f32 %v1725, %v1733
  %v1736 = vtanh.pop %v1735
  %1738 = vrot.lane.b32.xlu0 %v1736, 64
  %v1739 = vpop.permute.xlu0 %1738
  %v1741 = vmul.f32 %v1723, %v1739
  %v1742 = vadd.f32 %v1635, %v1741
  %v1744 = vsel %vm1421, %v1741, 0
  %1746 = vmatprep.subr.mxu0 0.0
  %1747 = vmatpush1.msra.mxu0 0.0
  %1748 = vmatprep.subr.mxu0 0.0
  %1749 = vmatpush1.msra.mxu0 0.0
  %1750 = vmatprep.subr.mxu0 0.0
  %1751 = vmatpush1.msra.mxu0 0.0
  %1752 = vmatprep.subr.mxu0 0.0
  %1753 = vmatpush1.msra.mxu0 0.0
  %1754 = vmatprep.subr.mxu0 0.0
  %1755 = vmatpush1.msra.mxu0 0.0
  %1756 = vmatprep.subr.mxu0 0.0
  %1757 = vmatpush1.msra.mxu0 0.0
  %1758 = vmatprep.subr.mxu0 0.0
  %1759 = vmatpush1.msra.mxu0 0.0
  %1760 = vmatprep.subr.mxu0 0.0
  %1761 = vmatpush1.msra.mxu0 0.0
  %1762 = vmatprep.subr.mxu0 %v1420
  %1763 = vmatpush1.msra.mxu0 %v1419
  %1764 = vmatprep.subr.mxu0 %v1418
  %1765 = vmatpush1.msra.mxu0 %v1417
  %1766 = vmatprep.subr.mxu0 %v1416
  %1767 = vmatpush1.msra.mxu0 %v1415
  %1768 = vmatprep.subr.mxu0 %v1414
  %1769 = vmatpush1.msra.mxu0 %v1413
  %1770 = vmatprep.subr.mxu0 %v1412
  %1771 = vmatpush1.msra.mxu0 %v1411
  %1772 = vmatprep.subr.mxu0 %v1410
  %1773 = vmatpush1.msra.mxu0 %v1409
  %1774 = vmatprep.subr.mxu0 %v1408
  %1775 = vmatpush1.msra.mxu0 %v1407
  %1776 = vmatprep.subr.mxu0 %v1406
  %1777 = vmatpush1.msra.mxu0 %v1405
  %1778 = vmatprep.subr.mxu0 0.0
  %1779 = vmatpush2.msra.mxu0 0.0
  %1780 = vmatprep.subr.mxu0 0.0
  %1781 = vmatpush2.msra.mxu0 0.0
  %1782 = vmatprep.subr.mxu0 0.0
  %1783 = vmatpush2.msra.mxu0 0.0
  %1784 = vmatprep.subr.mxu0 0.0
  %1785 = vmatpush2.msra.mxu0 0.0
  %1786 = vmatprep.subr.mxu0 0.0
  %1787 = vmatpush2.msra.mxu0 0.0
  %1788 = vmatprep.subr.mxu0 0.0
  %1789 = vmatpush2.msra.mxu0 0.0
  %1790 = vmatprep.subr.mxu0 0.0
  %1791 = vmatpush2.msra.mxu0 0.0
  %1792 = vmatprep.subr.mxu0 0.0
  %1793 = vmatpush2.msra.mxu0 0.0
  %1794 = vmatprep.subr.mxu0 0.0
  %1795 = vmatpush2.msra.mxu0 0.0
  %1796 = vmatprep.subr.mxu0 0.0
  %1797 = vmatpush2.msra.mxu0 0.0
  %1798 = vmatprep.subr.mxu0 0.0
  %1799 = vmatpush2.msra.mxu0 0.0
  %1800 = vmatprep.subr.mxu0 0.0
  %1801 = vmatpush2.msra.mxu0 0.0
  %1802 = vmatprep.subr.mxu0 0.0
  %1803 = vmatpush2.msra.mxu0 0.0
  %1804 = vmatprep.subr.mxu0 0.0
  %1805 = vmatpush2.msra.mxu0 0.0
  %1806 = vmatprep.subr.mxu0 0.0
  %1807 = vmatpush2.msra.mxu0 0.0
  %1808 = vmatprep.subr.mxu0 0.0
  %1809 = vmatpush2.msra.mxu0 0.0
  %1810 = vmatprep.mubr.f32.mxu0 0.0
  %1811 = vmatmul.mubr.f32.gmra.mxu0 %v1744
  %v1812 = vpop.f32.mrf.mxu0
  %v1813 = vadd.f32 0.0, %v1812
  %v1814 = vpop.f32.mrf.mxu0
  %v1815 = vadd.f32 0.0, %v1814
  %1816 = vdwg.mxu0
  %v1817 = vadd.f32 %v1095, %v1813
  %v1818 = vadd.f32 %v1096, %v1815
  %v1819 = vxor.u32 %v1817, 2147483648
  %v1820 = vxor.u32 %v1818, 2147483648
  %v1821 = vmul.f32 %v1819, 1.442695
  %v1822 = vpow.pop %v1821
  %v1823 = vmul.f32 %v1820, 1.442695
  %v1824 = vpow.pop %v1823
  %v1825 = vadd.f32 %v1822, 1.0
  %v1826 = vadd.f32 %v1824, 1.0
  %v1827 = vrcp.pop %v1825
  %v1828 = vmul.f32 1.0, %v1827
  %v1829 = vrcp.pop %v1826
  %v1830 = vmul.f32 1.0, %v1829
  %v1831 = vtanh.pop %v1818
  %v1832 = vmul.f32 %v1828, %v1735
  %1834 = vrot.lane.b32.xlu0 %v1831, 64
  %v1835 = vpop.permute.xlu0 %1834
  %v1837 = vmul.f32 %v1828, %v1835
  %1839 = vrot.lane.b32.xlu0 %v1837, 64
  %v1840 = vpop.permute.xlu0 %1839
  %v1842 = vadd.f32 %v1832, %v1840
  %v1843 = vtanh.pop %v1842
  %1845 = vrot.lane.b32.xlu0 %v1843, 64
  %v1846 = vpop.permute.xlu0 %1845
  %v1848 = vmul.f32 %v1830, %v1846
  %v1849 = vadd.f32 %v1742, %v1848
  %v1851 = vsel %vm1421, %v1848, 0
  %1853 = vmatprep.subr.mxu0 0.0
  %1854 = vmatpush1.msra.mxu0 0.0
  %1855 = vmatprep.subr.mxu0 0.0
  %1856 = vmatpush1.msra.mxu0 0.0
  %1857 = vmatprep.subr.mxu0 0.0
  %1858 = vmatpush1.msra.mxu0 0.0
  %1859 = vmatprep.subr.mxu0 0.0
  %1860 = vmatpush1.msra.mxu0 0.0
  %1861 = vmatprep.subr.mxu0 0.0
  %1862 = vmatpush1.msra.mxu0 0.0
  %1863 = vmatprep.subr.mxu0 0.0
  %1864 = vmatpush1.msra.mxu0 0.0
  %1865 = vmatprep.subr.mxu0 0.0
  %1866 = vmatpush1.msra.mxu0 0.0
  %1867 = vmatprep.subr.mxu0 0.0
  %1868 = vmatpush1.msra.mxu0 0.0
  %1869 = vmatprep.subr.mxu0 %v1420
  %1870 = vmatpush1.msra.mxu0 %v1419
  %1871 = vmatprep.subr.mxu0 %v1418
  %1872 = vmatpush1.msra.mxu0 %v1417
  %1873 = vmatprep.subr.mxu0 %v1416
  %1874 = vmatpush1.msra.mxu0 %v1415
  %1875 = vmatprep.subr.mxu0 %v1414
  %1876 = vmatpush1.msra.mxu0 %v1413
  %1877 = vmatprep.subr.mxu0 %v1412
  %1878 = vmatpush1.msra.mxu0 %v1411
  %1879 = vmatprep.subr.mxu0 %v1410
  %1880 = vmatpush1.msra.mxu0 %v1409
  %1881 = vmatprep.subr.mxu0 %v1408
  %1882 = vmatpush1.msra.mxu0 %v1407
  %1883 = vmatprep.subr.mxu0 %v1406
  %1884 = vmatpush1.msra.mxu0 %v1405
  %1885 = vmatprep.subr.mxu0 0.0
  %1886 = vmatpush2.msra.mxu0 0.0
  %1887 = vmatprep.subr.mxu0 0.0
  %1888 = vmatpush2.msra.mxu0 0.0
  %1889 = vmatprep.subr.mxu0 0.0
  %1890 = vmatpush2.msra.mxu0 0.0
  %1891 = vmatprep.subr.mxu0 0.0
  %1892 = vmatpush2.msra.mxu0 0.0
  %1893 = vmatprep.subr.mxu0 0.0
  %1894 = vmatpush2.msra.mxu0 0.0
  %1895 = vmatprep.subr.mxu0 0.0
  %1896 = vmatpush2.msra.mxu0 0.0
  %1897 = vmatprep.subr.mxu0 0.0
  %1898 = vmatpush2.msra.mxu0 0.0
  %1899 = vmatprep.subr.mxu0 0.0
  %1900 = vmatpush2.msra.mxu0 0.0
  %1901 = vmatprep.subr.mxu0 0.0
  %1902 = vmatpush2.msra.mxu0 0.0
  %1903 = vmatprep.subr.mxu0 0.0
  %1904 = vmatpush2.msra.mxu0 0.0
  %1905 = vmatprep.subr.mxu0 0.0
  %1906 = vmatpush2.msra.mxu0 0.0
  %1907 = vmatprep.subr.mxu0 0.0
  %1908 = vmatpush2.msra.mxu0 0.0
  %1909 = vmatprep.subr.mxu0 0.0
  %1910 = vmatpush2.msra.mxu0 0.0
  %1911 = vmatprep.subr.mxu0 0.0
  %1912 = vmatpush2.msra.mxu0 0.0
  %1913 = vmatprep.subr.mxu0 0.0
  %1914 = vmatpush2.msra.mxu0 0.0
  %1915 = vmatprep.subr.mxu0 0.0
  %1916 = vmatpush2.msra.mxu0 0.0
  %1917 = vmatprep.mubr.f32.mxu0 0.0
  %1918 = vmatmul.mubr.f32.gmra.mxu0 %v1851
  %v1919 = vpop.f32.mrf.mxu0
  %v1920 = vadd.f32 0.0, %v1919
  %v1921 = vpop.f32.mrf.mxu0
  %v1922 = vadd.f32 0.0, %v1921
  %1923 = vdwg.mxu0
  %v1924 = vadd.f32 %v1172, %v1920
  %v1925 = vadd.f32 %v1173, %v1922
  %v1926 = vxor.u32 %v1924, 2147483648
  %v1927 = vxor.u32 %v1925, 2147483648
  %v1928 = vmul.f32 %v1926, 1.442695
  %v1929 = vpow.pop %v1928
  %v1930 = vmul.f32 %v1927, 1.442695
  %v1931 = vpow.pop %v1930
  %v1932 = vadd.f32 %v1929, 1.0
  %v1933 = vadd.f32 %v1931, 1.0
  %v1934 = vrcp.pop %v1932
  %v1935 = vmul.f32 1.0, %v1934
  %v1936 = vrcp.pop %v1933
  %v1937 = vmul.f32 1.0, %v1936
  %v1938 = vtanh.pop %v1925
  %v1939 = vmul.f32 %v1935, %v1842
  %1941 = vrot.lane.b32.xlu0 %v1938, 64
  %v1942 = vpop.permute.xlu0 %1941
  %v1944 = vmul.f32 %v1935, %v1942
  %1946 = vrot.lane.b32.xlu0 %v1944, 64
  %v1947 = vpop.permute.xlu0 %1946
  %v1949 = vadd.f32 %v1939, %v1947
  %v1950 = vtanh.pop %v1949
  %1952 = vrot.lane.b32.xlu0 %v1950, 64
  %v1953 = vpop.permute.xlu0 %1952
  %v1955 = vmul.f32 %v1937, %v1953
  %v1956 = vadd.f32 %v1849, %v1955
  %v1958 = vsel %vm1421, %v1955, 0
  %1960 = vmatprep.subr.mxu0 0.0
  %1961 = vmatpush1.msra.mxu0 0.0
  %1962 = vmatprep.subr.mxu0 0.0
  %1963 = vmatpush1.msra.mxu0 0.0
  %1964 = vmatprep.subr.mxu0 0.0
  %1965 = vmatpush1.msra.mxu0 0.0
  %1966 = vmatprep.subr.mxu0 0.0
  %1967 = vmatpush1.msra.mxu0 0.0
  %1968 = vmatprep.subr.mxu0 0.0
  %1969 = vmatpush1.msra.mxu0 0.0
  %1970 = vmatprep.subr.mxu0 0.0
  %1971 = vmatpush1.msra.mxu0 0.0
  %1972 = vmatprep.subr.mxu0 0.0
  %1973 = vmatpush1.msra.mxu0 0.0
  %1974 = vmatprep.subr.mxu0 0.0
  %1975 = vmatpush1.msra.mxu0 0.0
  %1976 = vmatprep.subr.mxu0 %v1420
  %1977 = vmatpush1.msra.mxu0 %v1419
  %1978 = vmatprep.subr.mxu0 %v1418
  %1979 = vmatpush1.msra.mxu0 %v1417
  %1980 = vmatprep.subr.mxu0 %v1416
  %1981 = vmatpush1.msra.mxu0 %v1415
  %1982 = vmatprep.subr.mxu0 %v1414
  %1983 = vmatpush1.msra.mxu0 %v1413
  %1984 = vmatprep.subr.mxu0 %v1412
  %1985 = vmatpush1.msra.mxu0 %v1411
  %1986 = vmatprep.subr.mxu0 %v1410
  %1987 = vmatpush1.msra.mxu0 %v1409
  %1988 = vmatprep.subr.mxu0 %v1408
  %1989 = vmatpush1.msra.mxu0 %v1407
  %1990 = vmatprep.subr.mxu0 %v1406
  %1991 = vmatpush1.msra.mxu0 %v1405
  %1992 = vmatprep.subr.mxu0 0.0
  %1993 = vmatpush2.msra.mxu0 0.0
  %1994 = vmatprep.subr.mxu0 0.0
  %1995 = vmatpush2.msra.mxu0 0.0
  %1996 = vmatprep.subr.mxu0 0.0
  %1997 = vmatpush2.msra.mxu0 0.0
  %1998 = vmatprep.subr.mxu0 0.0
  %1999 = vmatpush2.msra.mxu0 0.0
  %2000 = vmatprep.subr.mxu0 0.0
  %2001 = vmatpush2.msra.mxu0 0.0
  %2002 = vmatprep.subr.mxu0 0.0
  %2003 = vmatpush2.msra.mxu0 0.0
  %2004 = vmatprep.subr.mxu0 0.0
  %2005 = vmatpush2.msra.mxu0 0.0
  %2006 = vmatprep.subr.mxu0 0.0
  %2007 = vmatpush2.msra.mxu0 0.0
  %2008 = vmatprep.subr.mxu0 0.0
  %2009 = vmatpush2.msra.mxu0 0.0
  %2010 = vmatprep.subr.mxu0 0.0
  %2011 = vmatpush2.msra.mxu0 0.0
  %2012 = vmatprep.subr.mxu0 0.0
  %2013 = vmatpush2.msra.mxu0 0.0
  %2014 = vmatprep.subr.mxu0 0.0
  %2015 = vmatpush2.msra.mxu0 0.0
  %2016 = vmatprep.subr.mxu0 0.0
  %2017 = vmatpush2.msra.mxu0 0.0
  %2018 = vmatprep.subr.mxu0 0.0
  %2019 = vmatpush2.msra.mxu0 0.0
  %2020 = vmatprep.subr.mxu0 0.0
  %2021 = vmatpush2.msra.mxu0 0.0
  %2022 = vmatprep.subr.mxu0 0.0
  %2023 = vmatpush2.msra.mxu0 0.0
  %2024 = vmatprep.mubr.f32.mxu0 0.0
  %2025 = vmatmul.mubr.f32.gmra.mxu0 %v1958
  %v2026 = vpop.f32.mrf.mxu0
  %v2027 = vadd.f32 0.0, %v2026
  %v2028 = vpop.f32.mrf.mxu0
  %v2029 = vadd.f32 0.0, %v2028
  %2030 = vdwg.mxu0
  %v2031 = vadd.f32 %v1249, %v2027
  %v2032 = vadd.f32 %v1250, %v2029
  %v2033 = vxor.u32 %v2031, 2147483648
  %v2034 = vxor.u32 %v2032, 2147483648
  %v2035 = vmul.f32 %v2033, 1.442695
  %v2036 = vpow.pop %v2035
  %v2037 = vmul.f32 %v2034, 1.442695
  %v2038 = vpow.pop %v2037
  %v2039 = vadd.f32 %v2036, 1.0
  %v2040 = vadd.f32 %v2038, 1.0
  %v2041 = vrcp.pop %v2039
  %v2042 = vmul.f32 1.0, %v2041
  %v2043 = vrcp.pop %v2040
  %v2044 = vmul.f32 1.0, %v2043
  %v2045 = vtanh.pop %v2032
  %v2046 = vmul.f32 %v2042, %v1949
  %2048 = vrot.lane.b32.xlu0 %v2045, 64
  %v2049 = vpop.permute.xlu0 %2048
  %v2051 = vmul.f32 %v2042, %v2049
  %2053 = vrot.lane.b32.xlu0 %v2051, 64
  %v2054 = vpop.permute.xlu0 %2053
  %v2056 = vadd.f32 %v2046, %v2054
  %v2057 = vtanh.pop %v2056
  %2059 = vrot.lane.b32.xlu0 %v2057, 64
  %v2060 = vpop.permute.xlu0 %2059
  %v2062 = vmul.f32 %v2044, %v2060
  %v2063 = vadd.f32 %v1956, %v2062
  %v2065 = vsel %vm1421, %v2062, 0
  %2067 = vmatprep.subr.mxu0 0.0
  %2068 = vmatpush1.msra.mxu0 0.0
  %2069 = vmatprep.subr.mxu0 0.0
  %2070 = vmatpush1.msra.mxu0 0.0
  %2071 = vmatprep.subr.mxu0 0.0
  %2072 = vmatpush1.msra.mxu0 0.0
  %2073 = vmatprep.subr.mxu0 0.0
  %2074 = vmatpush1.msra.mxu0 0.0
  %2075 = vmatprep.subr.mxu0 0.0
  %2076 = vmatpush1.msra.mxu0 0.0
  %2077 = vmatprep.subr.mxu0 0.0
  %2078 = vmatpush1.msra.mxu0 0.0
  %2079 = vmatprep.subr.mxu0 0.0
  %2080 = vmatpush1.msra.mxu0 0.0
  %2081 = vmatprep.subr.mxu0 0.0
  %2082 = vmatpush1.msra.mxu0 0.0
  %2083 = vmatprep.subr.mxu0 %v1420
  %2084 = vmatpush1.msra.mxu0 %v1419
  %2085 = vmatprep.subr.mxu0 %v1418
  %2086 = vmatpush1.msra.mxu0 %v1417
  %2087 = vmatprep.subr.mxu0 %v1416
  %2088 = vmatpush1.msra.mxu0 %v1415
  %2089 = vmatprep.subr.mxu0 %v1414
  %2090 = vmatpush1.msra.mxu0 %v1413
  %2091 = vmatprep.subr.mxu0 %v1412
  %2092 = vmatpush1.msra.mxu0 %v1411
  %2093 = vmatprep.subr.mxu0 %v1410
  %2094 = vmatpush1.msra.mxu0 %v1409
  %2095 = vmatprep.subr.mxu0 %v1408
  %2096 = vmatpush1.msra.mxu0 %v1407
  %2097 = vmatprep.subr.mxu0 %v1406
  %2098 = vmatpush1.msra.mxu0 %v1405
  %2099 = vmatprep.subr.mxu0 0.0
  %2100 = vmatpush2.msra.mxu0 0.0
  %2101 = vmatprep.subr.mxu0 0.0
  %2102 = vmatpush2.msra.mxu0 0.0
  %2103 = vmatprep.subr.mxu0 0.0
  %2104 = vmatpush2.msra.mxu0 0.0
  %2105 = vmatprep.subr.mxu0 0.0
  %2106 = vmatpush2.msra.mxu0 0.0
  %2107 = vmatprep.subr.mxu0 0.0
  %2108 = vmatpush2.msra.mxu0 0.0
  %2109 = vmatprep.subr.mxu0 0.0
  %2110 = vmatpush2.msra.mxu0 0.0
  %2111 = vmatprep.subr.mxu0 0.0
  %2112 = vmatpush2.msra.mxu0 0.0
  %2113 = vmatprep.subr.mxu0 0.0
  %2114 = vmatpush2.msra.mxu0 0.0
  %2115 = vmatprep.subr.mxu0 0.0
  %2116 = vmatpush2.msra.mxu0 0.0
  %2117 = vmatprep.subr.mxu0 0.0
  %2118 = vmatpush2.msra.mxu0 0.0
  %2119 = vmatprep.subr.mxu0 0.0
  %2120 = vmatpush2.msra.mxu0 0.0
  %2121 = vmatprep.subr.mxu0 0.0
  %2122 = vmatpush2.msra.mxu0 0.0
  %2123 = vmatprep.subr.mxu0 0.0
  %2124 = vmatpush2.msra.mxu0 0.0
  %2125 = vmatprep.subr.mxu0 0.0
  %2126 = vmatpush2.msra.mxu0 0.0
  %2127 = vmatprep.subr.mxu0 0.0
  %2128 = vmatpush2.msra.mxu0 0.0
  %2129 = vmatprep.subr.mxu0 0.0
  %2130 = vmatpush2.msra.mxu0 0.0
  %2131 = vmatprep.mubr.f32.mxu0 0.0
  %2132 = vmatmul.mubr.f32.gmra.mxu0 %v2065
  %v2133 = vpop.f32.mrf.mxu0
  %v2134 = vadd.f32 0.0, %v2133
  %v2135 = vpop.f32.mrf.mxu0
  %v2136 = vadd.f32 0.0, %v2135
  %2137 = vdwg.mxu0
  %v2138 = vadd.f32 %v1326, %v2134
  %v2139 = vadd.f32 %v1327, %v2136
  %v2140 = vxor.u32 %v2138, 2147483648
  %v2141 = vxor.u32 %v2139, 2147483648
  %v2142 = vmul.f32 %v2140, 1.442695
  %v2143 = vpow.pop %v2142
  %v2144 = vmul.f32 %v2141, 1.442695
  %v2145 = vpow.pop %v2144
  %v2146 = vadd.f32 %v2143, 1.0
  %v2147 = vadd.f32 %v2145, 1.0
  %v2148 = vrcp.pop %v2146
  %v2149 = vmul.f32 1.0, %v2148
  %v2150 = vrcp.pop %v2147
  %v2151 = vmul.f32 1.0, %v2150
  %v2152 = vtanh.pop %v2139
  %v2153 = vmul.f32 %v2149, %v2056
  %2155 = vrot.lane.b32.xlu0 %v2152, 64
  %v2156 = vpop.permute.xlu0 %2155
  %v2158 = vmul.f32 %v2149, %v2156
  %2160 = vrot.lane.b32.xlu0 %v2158, 64
  %v2161 = vpop.permute.xlu0 %2160
  %v2163 = vadd.f32 %v2153, %v2161
  %v2164 = vtanh.pop %v2163
  %2166 = vrot.lane.b32.xlu0 %v2164, 64
  %v2167 = vpop.permute.xlu0 %2166
  %v2169 = vmul.f32 %v2151, %v2167
  %v2170 = vadd.f32 %v2063, %v2169
  %v2172 = vsel %vm1421, %v2169, 0
  %2174 = vmatprep.subr.mxu0 0.0
  %2175 = vmatpush1.msra.mxu0 0.0
  %2176 = vmatprep.subr.mxu0 0.0
  %2177 = vmatpush1.msra.mxu0 0.0
  %2178 = vmatprep.subr.mxu0 0.0
  %2179 = vmatpush1.msra.mxu0 0.0
  %2180 = vmatprep.subr.mxu0 0.0
  %2181 = vmatpush1.msra.mxu0 0.0
  %2182 = vmatprep.subr.mxu0 0.0
  %2183 = vmatpush1.msra.mxu0 0.0
  %2184 = vmatprep.subr.mxu0 0.0
  %2185 = vmatpush1.msra.mxu0 0.0
  %2186 = vmatprep.subr.mxu0 0.0
  %2187 = vmatpush1.msra.mxu0 0.0
  %2188 = vmatprep.subr.mxu0 0.0
  %2189 = vmatpush1.msra.mxu0 0.0
  %2190 = vmatprep.subr.mxu0 %v1420
  %2191 = vmatpush1.msra.mxu0 %v1419
  %2192 = vmatprep.subr.mxu0 %v1418
  %2193 = vmatpush1.msra.mxu0 %v1417
  %2194 = vmatprep.subr.mxu0 %v1416
  %2195 = vmatpush1.msra.mxu0 %v1415
  %2196 = vmatprep.subr.mxu0 %v1414
  %2197 = vmatpush1.msra.mxu0 %v1413
  %2198 = vmatprep.subr.mxu0 %v1412
  %2199 = vmatpush1.msra.mxu0 %v1411
  %2200 = vmatprep.subr.mxu0 %v1410
  %2201 = vmatpush1.msra.mxu0 %v1409
  %2202 = vmatprep.subr.mxu0 %v1408
  %2203 = vmatpush1.msra.mxu0 %v1407
  %2204 = vmatprep.subr.mxu0 %v1406
  %2205 = vmatpush1.msra.mxu0 %v1405
  %2206 = vmatprep.subr.mxu0 0.0
  %2207 = vmatpush2.msra.mxu0 0.0
  %2208 = vmatprep.subr.mxu0 0.0
  %2209 = vmatpush2.msra.mxu0 0.0
  %2210 = vmatprep.subr.mxu0 0.0
  %2211 = vmatpush2.msra.mxu0 0.0
  %2212 = vmatprep.subr.mxu0 0.0
  %2213 = vmatpush2.msra.mxu0 0.0
  %2214 = vmatprep.subr.mxu0 0.0
  %2215 = vmatpush2.msra.mxu0 0.0
  %2216 = vmatprep.subr.mxu0 0.0
  %2217 = vmatpush2.msra.mxu0 0.0
  %2218 = vmatprep.subr.mxu0 0.0
  %2219 = vmatpush2.msra.mxu0 0.0
  %2220 = vmatprep.subr.mxu0 0.0
  %2221 = vmatpush2.msra.mxu0 0.0
  %2222 = vmatprep.subr.mxu0 0.0
  %2223 = vmatpush2.msra.mxu0 0.0
  %2224 = vmatprep.subr.mxu0 0.0
  %2225 = vmatpush2.msra.mxu0 0.0
  %2226 = vmatprep.subr.mxu0 0.0
  %2227 = vmatpush2.msra.mxu0 0.0
  %2228 = vmatprep.subr.mxu0 0.0
  %2229 = vmatpush2.msra.mxu0 0.0
  %2230 = vmatprep.subr.mxu0 0.0
  %2231 = vmatpush2.msra.mxu0 0.0
  %2232 = vmatprep.subr.mxu0 0.0
  %2233 = vmatpush2.msra.mxu0 0.0
  %2234 = vmatprep.subr.mxu0 0.0
  %2235 = vmatpush2.msra.mxu0 0.0
  %2236 = vmatprep.subr.mxu0 0.0
  %2237 = vmatpush2.msra.mxu0 0.0
  %2238 = vmatprep.mubr.f32.mxu0 0.0
  %2239 = vmatmul.mubr.f32.gmra.mxu0 %v2172
  %v2240 = vpop.f32.mrf.mxu0
  %v2241 = vadd.f32 0.0, %v2240
  %v2242 = vpop.f32.mrf.mxu0
  %v2243 = vadd.f32 0.0, %v2242
  %2244 = vdwg.mxu0
  %v2245 = vadd.f32 %v1403, %v2241
  %v2246 = vadd.f32 %v1404, %v2243
  %v2247 = vxor.u32 %v2245, 2147483648
  %v2248 = vxor.u32 %v2246, 2147483648
  %v2249 = vmul.f32 %v2247, 1.442695
  %v2250 = vpow.pop %v2249
  %v2251 = vmul.f32 %v2248, 1.442695
  %v2252 = vpow.pop %v2251
  %v2253 = vadd.f32 %v2250, 1.0
  %v2254 = vadd.f32 %v2252, 1.0
  %v2255 = vrcp.pop %v2253
  %v2256 = vmul.f32 1.0, %v2255
  %v2257 = vrcp.pop %v2254
  %v2258 = vmul.f32 1.0, %v2257
  %v2259 = vtanh.pop %v2246
  %v2260 = vmul.f32 %v2256, %v2163
  %2262 = vrot.lane.b32.xlu0 %v2259, 64
  %v2263 = vpop.permute.xlu0 %2262
  %v2265 = vmul.f32 %v2256, %v2263
  %2267 = vrot.lane.b32.xlu0 %v2265, 64
  %v2268 = vpop.permute.xlu0 %2267
  %v2270 = vadd.f32 %v2260, %v2268
  %v2271 = vtanh.pop %v2270
  %2273 = vrot.lane.b32.xlu0 %v2271, 64
  %v2274 = vpop.permute.xlu0 %2273
  %v2276 = vmul.f32 %v2258, %v2274
  %v2277 = vadd.f32 %v2170, %v2276
  %v2278 = vld [vmem:[%s10] sm:$0x1]
  %v2280 = vlaneseq
  %v2281 = vshrl.u32 %v2280, 7
  %v2282 = vsub.s32 0, %v2281
  %v2283 = vrot.slane %v2278, %v2282
  %v2285 = vmul.f32 %v2277, %v2283
  %v2286 = vsel %vm546, %v2285, 0.0
  %2287 = vadd.xlane.f32.xlu0 %v2286
  %v2288 = vpop.xlane.xlu0 %2287
  %2290 = vrot.lane.b32.xlu0 %v2285, 96
  %v2291 = vpop.permute.xlu0 %2290
  %v2293 = vsel %vm546, %v2291, 0.0
  %2294 = vadd.xlane.f32.xlu0 %v2293
  %v2295 = vpop.xlane.xlu0 %2294
  %v2296 = vxor.u32 %v2288, 2147483648
  %v2297 = vmul.f32 %v2296, 1.442695
  %v2298 = vpow.pop %v2297
  %v2299 = vadd.f32 %v2298, 1.0
  %v2300 = vrcp.pop %v2299
  %v2301 = vmul.f32 1.0, %v2300
  %v2302 = vxor.u32 %v2295, 2147483648
  %v2303 = vmul.f32 %v2302, 1.442695
  %v2304 = vpow.pop %v2303
  %v2305 = vadd.f32 %v2304, 1.0
  %v2306 = vrcp.pop %v2305
  %v2307 = vmul.f32 1.0, %v2306
  %v2308 = vadd.f32 %v2301, %v2307
  %v2309 = vmul.f32 %v2308, 0.5
  %vm2310 = vcmask 1024
  %2311 = vst.msk [vmem:[%s11] sm:$0x3] %vm2310, %v2309
  // Predicated region
  $region46: #{lscnn_forward.1} parent=0 // pred_check
    _
  $region47: #{lscnn_forward.1} parent=0 // pred_check_branch
    %2313 = sbr.rel (0) target = $region49
  $region48: #{lscnn_forward.1} parent=0 // pred_region
    _
  $region49: #{lscnn_forward.1} parent=0 // pred_fallthru
    _
  // Predicated region
  $region50: #{lscnn_forward.1} parent=0 // pred_check
    _
  $region51: #{lscnn_forward.1} parent=0 // pred_check_branch
    %2315 = sbr.rel (0) target = $region53
  $region52: #{lscnn_forward.1} parent=0 // pred_region
    _
  $region53: #{lscnn_forward.1} parent=0 // pred_fallthru
    _

</llo_original>
